<compile_context>
chip_gen: v7x
topology: tpu7x:2x2x1
jax: 0.10.0
libtpu: 0.0.40
codegen_flags: <defaults>
</compile_context>

<pallas_src>
import numpy as np
import jax
import jax.numpy as jnp
from jax.experimental import pallas as pl
from jax.experimental.pallas import tpu as pltpu

PATCH = 8


# ----------------------------- Pallas kernel -----------------------------
def _build_kernel(C, H, W):
    HW = H * W

    def kernel(x_ref, g1_ref, b1_ref, w1_ref, w9_ref, msk_ref,
               tfwd_ref, tinv_ref, g2_ref, b2_ref, wp_ref, o_ref):
        x = x_ref[0]                                            # (C, HW) f32

        # ---- norm1: WithBias LayerNorm over the channel (sublane) axis ----
        mu = jnp.mean(x, axis=0, keepdims=True)                 # (1, HW)
        var = jnp.mean((x - mu) ** 2, axis=0, keepdims=True)
        xn = (x - mu) * jax.lax.rsqrt(var + 1e-5) * g1_ref[...] + b1_ref[...]

        # ---- to_hidden: 1x1 conv == channel matmul, lane-dense N=HW ----
        hidden = jnp.dot(w1_ref[...], xn,
                         preferred_element_type=jnp.float32)    # (6C, HW)

        # ---- to_hidden_dw: depthwise 3x3 conv (padding=1) as rolls + masks ----
        def tap_term(tap):
            oy, ox = tap // 3 - 1, tap % 3 - 1
            off = oy * W + ox                                    # read pixel p + off
            if off == 0:
                s = hidden
            else:
                s = pltpu.roll(hidden, shift=(-off) % HW, axis=1)
            # msk zeroes the pixels whose source fell outside the image (zero pad);
            # w9 is the per-channel tap weight (broadcast along lanes).
            return s * msk_ref[tap] * w9_ref[tap]

        dw = tap_term(0)
        for tap in range(1, 9):
            dw = dw + tap_term(tap)                              # (6C, HW)

        # ---- per-8x8-patch FFT correlation:
        # rfft2(q)*rfft2(k) -> irfft2  ==  Re(IDFT2(DFT2(q)*DFT2(k))),
        # realized with block-structured (HW x HW) DFT matrices on the pixel axis.
        # q and k share one forward pass; real/imag are fused in one wide matmul.
        fwd = jnp.dot(dw[0:4 * C], tfwd_ref[...],
                      preferred_element_type=jnp.float32)        # (4C, 2*HW)
        qr = fwd[0:2 * C, 0:HW]
        qi = fwd[0:2 * C, HW:2 * HW]
        kr = fwd[2 * C:4 * C, 0:HW]
        ki = fwd[2 * C:4 * C, HW:2 * HW]
        xr = qr * kr - qi * ki
        xi = qr * ki + qi * kr
        corr = jnp.dot(jnp.concatenate([xr, xi], axis=1), tinv_ref[...],
                       preferred_element_type=jnp.float32)       # (2C, HW)

        # ---- FSAS norm: WithBias LayerNorm over the 2C channel (sublane) axis ----
        mu2 = jnp.mean(corr, axis=0, keepdims=True)
        var2 = jnp.mean((corr - mu2) ** 2, axis=0, keepdims=True)
        nrm = (corr - mu2) * jax.lax.rsqrt(var2 + 1e-5) * g2_ref[...] + b2_ref[...]

        # ---- gate with v, project_out (1x1 conv), residual; lane-dense store ----
        gated = dw[4 * C:6 * C] * nrm                            # (2C, HW)
        proj = jnp.dot(wp_ref[...], gated,
                       preferred_element_type=jnp.float32)       # (C, HW)
        o_ref[0] = x + proj

    return kernel


# ------------------------------ glue helpers ------------------------------
def make_dft_consts(H, W):
    """Forward/inverse per-patch 2D DFT on the pixel axis, for the pixels-in-lanes
    layout (data (rows=channels, cols=pixels) is right-multiplied by these)."""
    idx = np.arange(PATCH)
    F8 = np.exp(-2j * np.pi * np.outer(idx, idx) / PATCH)          # forward DFT
    G8 = np.exp(+2j * np.pi * np.outer(idx, idx) / PATCH) / PATCH  # inverse DFT
    FH = np.kron(np.eye(H // PATCH), F8)
    FW = np.kron(np.eye(W // PATCH), F8)
    GH = np.kron(np.eye(H // PATCH), G8)
    GW = np.kron(np.eye(W // PATCH), G8)
    T = np.kron(FH, FW)      # (HW, HW) per-patch 2D DFT
    TG = np.kron(GH, GW)     # (HW, HW) per-patch 2D IDFT
    t_fwd = np.concatenate([T.real.T, T.imag.T], axis=1).astype(np.float32)    # (HW, 2HW)
    t_inv = np.concatenate([TG.real.T, -TG.imag.T], axis=0).astype(np.float32)  # (2HW, HW)
    return t_fwd, t_inv


def make_tap_masks(H, W):
    """mask[tap, 0, p] = 1 iff the 3x3 tap's source pixel for p is inside the image."""
    HW = H * W
    m = np.zeros((9, 1, HW), np.float32)
    yy, xx = np.meshgrid(np.arange(H), np.arange(W), indexing='ij')
    for dy in range(3):
        for dx in range(3):
            oy, ox = dy - 1, dx - 1
            valid = ((yy + oy >= 0) & (yy + oy < H) &
                     (xx + ox >= 0) & (xx + ox < W))
            m[dy * 3 + dx, 0] = valid.reshape(HW).astype(np.float32)
    return m


def transformer_block(x_nchw, params):
    B, C, H, W = x_nchw.shape
    HW = H * W

    # pixels-in-lanes layout: (B, C, H*W); row-major spatial flatten p = h*W + w.
    x3 = x_nchw.reshape(B, C, HW)

    g1 = params['g1'].reshape(C, 1)
    b1 = params['b1'].reshape(C, 1)
    w1 = params['w1']                                                    # (6C, C)
    w9 = jnp.transpose(params['wdw'][:, 0].reshape(6 * C, 9), (1, 0))[..., None]  # (9, 6C, 1)
    g2 = params['g2'].reshape(2 * C, 1)
    b2 = params['b2'].reshape(2 * C, 1)
    wp = params['wp']                                                    # (C, 2C)

    t_fwd, t_inv = make_dft_consts(H, W)
    t_fwd = jnp.asarray(t_fwd)
    t_inv = jnp.asarray(t_inv)
    masks = jnp.asarray(make_tap_masks(H, W))

    def const_spec(shape):
        nd = len(shape)
        return pl.BlockSpec(shape, lambda b, _nd=nd: (0,) * _nd)

    grid_spec = pltpu.PrefetchScalarGridSpec(
        num_scalar_prefetch=0,
        grid=(B,),
        in_specs=[
            pl.BlockSpec((1, C, HW), lambda b: (b, 0, 0)),   # x
            const_spec((C, 1)), const_spec((C, 1)),          # g1, b1
            const_spec((6 * C, C)),                          # to_hidden weight
            const_spec((9, 6 * C, 1)),                       # depthwise tap weights
            const_spec((9, 1, HW)),                          # tap boundary masks
            const_spec((HW, 2 * HW)),                        # [Tr^T | Ti^T]
            const_spec((2 * HW, HW)),                        # [TGr^T ; -TGi^T]
            const_spec((2 * C, 1)), const_spec((2 * C, 1)),  # g2, b2
            const_spec((C, 2 * C)),                          # project_out weight
        ],
        out_specs=pl.BlockSpec((1, C, HW), lambda b: (b, 0, 0)),
    )

    out_cl = pl.pallas_call(
        _build_kernel(C, H, W),
        out_shape=jax.ShapeDtypeStruct((B, C, HW), jnp.float32),
        grid_spec=grid_spec,
        compiler_params=pltpu.CompilerParams(
            dimension_semantics=("parallel",)),
    )(x3, g1, b1, w1, w9, masks, t_fwd, t_inv, g2, b2, wp)

    # module returns rearrange(x, 'b c h w -> b (h w) c'): glue transpose outside.
    return jnp.transpose(out_cl, (0, 2, 1))


# ------------------------- pure-JAX reference (check) -------------------------
def reference_forward(x_nchw, params):
    B, C, H, W = x_nchw.shape
    # norm1 (WithBias LayerNorm over channels, applied in 'b (h w) c' layout)
    x3 = jnp.transpose(x_nchw, (0, 2, 3, 1)).reshape(B, H * W, C)
    mu = x3.mean(-1, keepdims=True)
    var = ((x3 - mu) ** 2).mean(-1, keepdims=True)
    xn3 = (x3 - mu) / jnp.sqrt(var + 1e-5) * params['g1'] + params['b1']
    xn = jnp.transpose(xn3.reshape(B, H, W, C), (0, 3, 1, 2))
    # to_hidden 1x1 conv
    hidden = jnp.einsum('bchw,oc->bohw', xn, params['w1'])
    # depthwise 3x3 conv
    dw = jax.lax.conv_general_dilated(
        hidden, params['wdw'], window_strides=(1, 1),
        padding=((1, 1), (1, 1)), feature_group_count=6 * C,
        dimension_numbers=('NCHW', 'OIHW', 'NCHW'))
    q, k, v = jnp.split(dw, 3, axis=1)
    nph, npw = H // PATCH, W // PATCH

    def patchify(t):
        t = t.reshape(B, 2 * C, nph, PATCH, npw, PATCH)
        return jnp.transpose(t, (0, 1, 2, 4, 3, 5))

    qf = jnp.fft.rfft2(patchify(q).astype(jnp.float32))
    kf = jnp.fft.rfft2(patchify(k).astype(jnp.float32))
    out = jnp.fft.irfft2(qf * kf, s=(PATCH, PATCH))
    out = jnp.transpose(out, (0, 1, 2, 4, 3, 5)).reshape(B, 2 * C, H, W)
    # FSAS norm
    o3 = jnp.transpose(out, (0, 2, 3, 1)).reshape(B, H * W, 2 * C)
    mu2 = o3.mean(-1, keepdims=True)
    var2 = ((o3 - mu2) ** 2).mean(-1, keepdims=True)
    on3 = (o3 - mu2) / jnp.sqrt(var2 + 1e-5) * params['g2'] + params['b2']
    on = jnp.transpose(on3.reshape(B, H, W, 2 * C), (0, 3, 1, 2))
    gated = v * on
    proj = jnp.einsum('bchw,oc->bohw', gated, params['wp'])
    y = x_nchw + proj
    return jnp.transpose(y, (0, 2, 3, 1)).reshape(B, H * W, C)


# ----------------------------------- main -----------------------------------
if __name__ == "__main__":
    B, C, H, W = 2, 4, 16, 16          # dim=4, spatial 16x16 (multiple of patch_size=8)
    key = jax.random.PRNGKey(0)
    kx, k1, k2, k3 = jax.random.split(key, 4)
    x = jax.random.normal(kx, (B, C, H, W), jnp.float32)

    params = {
        'g1': jnp.ones((C,), jnp.float32),                              # norm1 weight
        'b1': jnp.zeros((C,), jnp.float32),                             # norm1 bias
        'w1': 0.2 * jax.random.normal(k1, (6 * C, C), jnp.float32),     # to_hidden (1x1, no bias)
        'wdw': 0.2 * jax.random.normal(k2, (6 * C, 1, 3, 3), jnp.float32),  # depthwise 3x3
        'g2': jnp.ones((2 * C,), jnp.float32),                          # FSAS norm weight
        'b2': jnp.zeros((2 * C,), jnp.float32),                         # FSAS norm bias
        'wp': 0.2 * jax.random.normal(k3, (C, 2 * C), jnp.float32),     # project_out (1x1, no bias)
    }

    out = transformer_block(x, params)
    out = jax.block_until_ready(out)

    ref = reference_forward(x, params)
    assert out.shape == (B, H * W, C)
    np.testing.assert_allclose(np.asarray(out), np.asarray(ref), atol=5e-3, rtol=5e-3)
    print("KERNEL_OK")
</pallas_src>

<mosaic_0001>
module attributes {stable_mosaic.version = 11 : i64} {
  func.func @kernel(%arg0: i32, %arg1: memref<1x4x256xf32, #tpu.memory_space<vmem>>, %arg2: memref<4x1xf32, #tpu.memory_space<vmem>>, %arg3: memref<4x1xf32, #tpu.memory_space<vmem>>, %arg4: memref<24x4xf32, #tpu.memory_space<vmem>>, %arg5: memref<9x24x1xf32, #tpu.memory_space<vmem>>, %arg6: memref<9x1x256xf32, #tpu.memory_space<vmem>>, %arg7: memref<256x512xf32, #tpu.memory_space<vmem>>, %arg8: memref<512x256xf32, #tpu.memory_space<vmem>>, %arg9: memref<8x1xf32, #tpu.memory_space<vmem>>, %arg10: memref<8x1xf32, #tpu.memory_space<vmem>>, %arg11: memref<4x8xf32, #tpu.memory_space<vmem>>, %arg12: memref<1x4x256xf32, #tpu.memory_space<vmem>>) attributes {dimension_semantics = [#tpu.dimension_semantics<parallel>], iteration_bounds = array<i64: 2>, scalar_prefetch = 0 : i64, scratch_operands = 0 : i64, tpu.core_type = #tpu.core_type<tc>, window_params = [{transform_indices = @transform_0, window_bounds = array<i64: 1, 4, 256>}, {pipeline_mode = #tpu.pipeline_mode<synchronous>, transform_indices = @transform_1, window_bounds = array<i64: 4, 1>}, {pipeline_mode = #tpu.pipeline_mode<synchronous>, transform_indices = @transform_2, window_bounds = array<i64: 4, 1>}, {pipeline_mode = #tpu.pipeline_mode<synchronous>, transform_indices = @transform_3, window_bounds = array<i64: 24, 4>}, {pipeline_mode = #tpu.pipeline_mode<synchronous>, transform_indices = @transform_4, window_bounds = array<i64: 9, 24, 1>}, {pipeline_mode = #tpu.pipeline_mode<synchronous>, transform_indices = @transform_5, window_bounds = array<i64: 9, 1, 256>}, {pipeline_mode = #tpu.pipeline_mode<synchronous>, transform_indices = @transform_6, window_bounds = array<i64: 256, 512>}, {pipeline_mode = #tpu.pipeline_mode<synchronous>, transform_indices = @transform_7, window_bounds = array<i64: 512, 256>}, {pipeline_mode = #tpu.pipeline_mode<synchronous>, transform_indices = @transform_8, window_bounds = array<i64: 8, 1>}, {pipeline_mode = #tpu.pipeline_mode<synchronous>, transform_indices = @transform_9, window_bounds = array<i64: 8, 1>}, {pipeline_mode = #tpu.pipeline_mode<synchronous>, transform_indices = @transform_10, window_bounds = array<i64: 4, 8>}, {transform_indices = @transform_11, window_bounds = array<i64: 1, 4, 256>}]} {
    %c0 = arith.constant 0 : index
    %c0_0 = arith.constant 0 : index
    %c0_1 = arith.constant 0 : index
    %0 = vector.load %arg1[%c0, %c0_0, %c0_1] : memref<1x4x256xf32, #tpu.memory_space<vmem>>, vector<1x4x256xf32>
    %1 = vector.shape_cast %0 : vector<1x4x256xf32> to vector<4x256xf32>
    %cst = arith.constant dense<0.000000e+00> : vector<256xf32>
    %2 = vector.multi_reduction <add>, %1, %cst [0] : vector<4x256xf32> to vector<256xf32>
    %3 = vector.shape_cast %2 : vector<256xf32> to vector<1x256xf32>
    %cst_2 = arith.constant 4.000000e+00 : f32
    %4 = vector.broadcast %cst_2 : f32 to vector<1x256xf32>
    %5 = arith.divf %3, %4 : vector<1x256xf32>
    %6 = vector.broadcast %5 : vector<1x256xf32> to vector<4x256xf32>
    %7 = arith.subf %1, %6 : vector<4x256xf32>
    %8 = arith.mulf %7, %7 : vector<4x256xf32>
    %cst_3 = arith.constant dense<0.000000e+00> : vector<256xf32>
    %9 = vector.multi_reduction <add>, %8, %cst_3 [0] : vector<4x256xf32> to vector<256xf32>
    %10 = vector.shape_cast %9 : vector<256xf32> to vector<1x256xf32>
    %cst_4 = arith.constant 4.000000e+00 : f32
    %11 = vector.broadcast %cst_4 : f32 to vector<1x256xf32>
    %12 = arith.divf %10, %11 : vector<1x256xf32>
    %13 = vector.broadcast %5 : vector<1x256xf32> to vector<4x256xf32>
    %14 = arith.subf %1, %13 : vector<4x256xf32>
    %cst_5 = arith.constant 9.99999974E-6 : f32
    %15 = vector.broadcast %cst_5 : f32 to vector<1x256xf32>
    %16 = arith.addf %12, %15 : vector<1x256xf32>
    %17 = math.rsqrt %16 : vector<1x256xf32>
    %18 = vector.broadcast %17 : vector<1x256xf32> to vector<4x256xf32>
    %19 = arith.mulf %14, %18 : vector<4x256xf32>
    %c0_6 = arith.constant 0 : index
    %c0_7 = arith.constant 0 : index
    %20 = vector.load %arg2[%c0_6, %c0_7] : memref<4x1xf32, #tpu.memory_space<vmem>>, vector<4x1xf32>
    %21 = vector.broadcast %20 : vector<4x1xf32> to vector<4x256xf32>
    %22 = arith.mulf %19, %21 : vector<4x256xf32>
    %c0_8 = arith.constant 0 : index
    %c0_9 = arith.constant 0 : index
    %23 = vector.load %arg3[%c0_8, %c0_9] : memref<4x1xf32, #tpu.memory_space<vmem>>, vector<4x1xf32>
    %24 = vector.broadcast %23 : vector<4x1xf32> to vector<4x256xf32>
    %25 = arith.addf %22, %24 : vector<4x256xf32>
    %c0_10 = arith.constant 0 : index
    %c0_11 = arith.constant 0 : index
    %26 = vector.load %arg4[%c0_10, %c0_11] : memref<24x4xf32, #tpu.memory_space<vmem>>, vector<24x4xf32>
    %cst_12 = arith.constant dense<0.000000e+00> : vector<24x256xf32>
    %27 = tpu.matmul %26, %25, %cst_12 {dimension_numbers = #tpu.dot_dimension_numbers<[1], [0], [0], [1], [0, 0, 1, 1], [], []>} : vector<24x4xf32>, vector<4x256xf32>, vector<24x256xf32> -> vector<24x256xf32>
    %c17_i32 = arith.constant 17 : i32
    %28 = tpu.dynamic_rotate %27 by %c17_i32 dim 1 : vector<24x256xf32>, i32 -> vector<24x256xf32>
    %c0_13 = arith.constant 0 : index
    %c0_14 = arith.constant 0 : index
    %c0_15 = arith.constant 0 : index
    %29 = vector.load %arg6[%c0_13, %c0_14, %c0_15] : memref<9x1x256xf32, #tpu.memory_space<vmem>>, vector<1x1x256xf32>
    %30 = vector.shape_cast %29 : vector<1x1x256xf32> to vector<1x256xf32>
    %31 = vector.broadcast %30 : vector<1x256xf32> to vector<24x256xf32>
    %32 = arith.mulf %28, %31 : vector<24x256xf32>
    %c0_16 = arith.constant 0 : index
    %c0_17 = arith.constant 0 : index
    %c0_18 = arith.constant 0 : index
    %33 = vector.load %arg5[%c0_16, %c0_17, %c0_18] : memref<9x24x1xf32, #tpu.memory_space<vmem>>, vector<1x24x1xf32>
    %34 = vector.shape_cast %33 : vector<1x24x1xf32> to vector<24x1xf32>
    %35 = vector.broadcast %34 : vector<24x1xf32> to vector<24x256xf32>
    %36 = arith.mulf %32, %35 : vector<24x256xf32>
    %c16_i32 = arith.constant 16 : i32
    %37 = tpu.dynamic_rotate %27 by %c16_i32 dim 1 : vector<24x256xf32>, i32 -> vector<24x256xf32>
    %c1 = arith.constant 1 : index
    %c0_19 = arith.constant 0 : index
    %c0_20 = arith.constant 0 : index
    %38 = vector.load %arg6[%c1, %c0_19, %c0_20] : memref<9x1x256xf32, #tpu.memory_space<vmem>>, vector<1x1x256xf32>
    %39 = vector.shape_cast %38 : vector<1x1x256xf32> to vector<1x256xf32>
    %40 = vector.broadcast %39 : vector<1x256xf32> to vector<24x256xf32>
    %41 = arith.mulf %37, %40 : vector<24x256xf32>
    %c1_21 = arith.constant 1 : index
    %c0_22 = arith.constant 0 : index
    %c0_23 = arith.constant 0 : index
    %42 = vector.load %arg5[%c1_21, %c0_22, %c0_23] : memref<9x24x1xf32, #tpu.memory_space<vmem>>, vector<1x24x1xf32>
    %43 = vector.shape_cast %42 : vector<1x24x1xf32> to vector<24x1xf32>
    %44 = vector.broadcast %43 : vector<24x1xf32> to vector<24x256xf32>
    %45 = arith.mulf %41, %44 : vector<24x256xf32>
    %46 = arith.addf %36, %45 : vector<24x256xf32>
    %c15_i32 = arith.constant 15 : i32
    %47 = tpu.dynamic_rotate %27 by %c15_i32 dim 1 : vector<24x256xf32>, i32 -> vector<24x256xf32>
    %c2 = arith.constant 2 : index
    %c0_24 = arith.constant 0 : index
    %c0_25 = arith.constant 0 : index
    %48 = vector.load %arg6[%c2, %c0_24, %c0_25] : memref<9x1x256xf32, #tpu.memory_space<vmem>>, vector<1x1x256xf32>
    %49 = vector.shape_cast %48 : vector<1x1x256xf32> to vector<1x256xf32>
    %50 = vector.broadcast %49 : vector<1x256xf32> to vector<24x256xf32>
    %51 = arith.mulf %47, %50 : vector<24x256xf32>
    %c2_26 = arith.constant 2 : index
    %c0_27 = arith.constant 0 : index
    %c0_28 = arith.constant 0 : index
    %52 = vector.load %arg5[%c2_26, %c0_27, %c0_28] : memref<9x24x1xf32, #tpu.memory_space<vmem>>, vector<1x24x1xf32>
    %53 = vector.shape_cast %52 : vector<1x24x1xf32> to vector<24x1xf32>
    %54 = vector.broadcast %53 : vector<24x1xf32> to vector<24x256xf32>
    %55 = arith.mulf %51, %54 : vector<24x256xf32>
    %56 = arith.addf %46, %55 : vector<24x256xf32>
    %c1_i32 = arith.constant 1 : i32
    %57 = tpu.dynamic_rotate %27 by %c1_i32 dim 1 : vector<24x256xf32>, i32 -> vector<24x256xf32>
    %c3 = arith.constant 3 : index
    %c0_29 = arith.constant 0 : index
    %c0_30 = arith.constant 0 : index
    %58 = vector.load %arg6[%c3, %c0_29, %c0_30] : memref<9x1x256xf32, #tpu.memory_space<vmem>>, vector<1x1x256xf32>
    %59 = vector.shape_cast %58 : vector<1x1x256xf32> to vector<1x256xf32>
    %60 = vector.broadcast %59 : vector<1x256xf32> to vector<24x256xf32>
    %61 = arith.mulf %57, %60 : vector<24x256xf32>
    %c3_31 = arith.constant 3 : index
    %c0_32 = arith.constant 0 : index
    %c0_33 = arith.constant 0 : index
    %62 = vector.load %arg5[%c3_31, %c0_32, %c0_33] : memref<9x24x1xf32, #tpu.memory_space<vmem>>, vector<1x24x1xf32>
    %63 = vector.shape_cast %62 : vector<1x24x1xf32> to vector<24x1xf32>
    %64 = vector.broadcast %63 : vector<24x1xf32> to vector<24x256xf32>
    %65 = arith.mulf %61, %64 : vector<24x256xf32>
    %66 = arith.addf %56, %65 : vector<24x256xf32>
    %c4 = arith.constant 4 : index
    %c0_34 = arith.constant 0 : index
    %c0_35 = arith.constant 0 : index
    %67 = vector.load %arg6[%c4, %c0_34, %c0_35] : memref<9x1x256xf32, #tpu.memory_space<vmem>>, vector<1x1x256xf32>
    %68 = vector.shape_cast %67 : vector<1x1x256xf32> to vector<1x256xf32>
    %69 = vector.broadcast %68 : vector<1x256xf32> to vector<24x256xf32>
    %70 = arith.mulf %27, %69 : vector<24x256xf32>
    %c4_36 = arith.constant 4 : index
    %c0_37 = arith.constant 0 : index
    %c0_38 = arith.constant 0 : index
    %71 = vector.load %arg5[%c4_36, %c0_37, %c0_38] : memref<9x24x1xf32, #tpu.memory_space<vmem>>, vector<1x24x1xf32>
    %72 = vector.shape_cast %71 : vector<1x24x1xf32> to vector<24x1xf32>
    %73 = vector.broadcast %72 : vector<24x1xf32> to vector<24x256xf32>
    %74 = arith.mulf %70, %73 : vector<24x256xf32>
    %75 = arith.addf %66, %74 : vector<24x256xf32>
    %c255_i32 = arith.constant 255 : i32
    %76 = tpu.dynamic_rotate %27 by %c255_i32 dim 1 : vector<24x256xf32>, i32 -> vector<24x256xf32>
    %c5 = arith.constant 5 : index
    %c0_39 = arith.constant 0 : index
    %c0_40 = arith.constant 0 : index
    %77 = vector.load %arg6[%c5, %c0_39, %c0_40] : memref<9x1x256xf32, #tpu.memory_space<vmem>>, vector<1x1x256xf32>
    %78 = vector.shape_cast %77 : vector<1x1x256xf32> to vector<1x256xf32>
    %79 = vector.broadcast %78 : vector<1x256xf32> to vector<24x256xf32>
    %80 = arith.mulf %76, %79 : vector<24x256xf32>
    %c5_41 = arith.constant 5 : index
    %c0_42 = arith.constant 0 : index
    %c0_43 = arith.constant 0 : index
    %81 = vector.load %arg5[%c5_41, %c0_42, %c0_43] : memref<9x24x1xf32, #tpu.memory_space<vmem>>, vector<1x24x1xf32>
    %82 = vector.shape_cast %81 : vector<1x24x1xf32> to vector<24x1xf32>
    %83 = vector.broadcast %82 : vector<24x1xf32> to vector<24x256xf32>
    %84 = arith.mulf %80, %83 : vector<24x256xf32>
    %85 = arith.addf %75, %84 : vector<24x256xf32>
    %c241_i32 = arith.constant 241 : i32
    %86 = tpu.dynamic_rotate %27 by %c241_i32 dim 1 : vector<24x256xf32>, i32 -> vector<24x256xf32>
    %c6 = arith.constant 6 : index
    %c0_44 = arith.constant 0 : index
    %c0_45 = arith.constant 0 : index
    %87 = vector.load %arg6[%c6, %c0_44, %c0_45] : memref<9x1x256xf32, #tpu.memory_space<vmem>>, vector<1x1x256xf32>
    %88 = vector.shape_cast %87 : vector<1x1x256xf32> to vector<1x256xf32>
    %89 = vector.broadcast %88 : vector<1x256xf32> to vector<24x256xf32>
    %90 = arith.mulf %86, %89 : vector<24x256xf32>
    %c6_46 = arith.constant 6 : index
    %c0_47 = arith.constant 0 : index
    %c0_48 = arith.constant 0 : index
    %91 = vector.load %arg5[%c6_46, %c0_47, %c0_48] : memref<9x24x1xf32, #tpu.memory_space<vmem>>, vector<1x24x1xf32>
    %92 = vector.shape_cast %91 : vector<1x24x1xf32> to vector<24x1xf32>
    %93 = vector.broadcast %92 : vector<24x1xf32> to vector<24x256xf32>
    %94 = arith.mulf %90, %93 : vector<24x256xf32>
    %95 = arith.addf %85, %94 : vector<24x256xf32>
    %c240_i32 = arith.constant 240 : i32
    %96 = tpu.dynamic_rotate %27 by %c240_i32 dim 1 : vector<24x256xf32>, i32 -> vector<24x256xf32>
    %c7 = arith.constant 7 : index
    %c0_49 = arith.constant 0 : index
    %c0_50 = arith.constant 0 : index
    %97 = vector.load %arg6[%c7, %c0_49, %c0_50] : memref<9x1x256xf32, #tpu.memory_space<vmem>>, vector<1x1x256xf32>
    %98 = vector.shape_cast %97 : vector<1x1x256xf32> to vector<1x256xf32>
    %99 = vector.broadcast %98 : vector<1x256xf32> to vector<24x256xf32>
    %100 = arith.mulf %96, %99 : vector<24x256xf32>
    %c7_51 = arith.constant 7 : index
    %c0_52 = arith.constant 0 : index
    %c0_53 = arith.constant 0 : index
    %101 = vector.load %arg5[%c7_51, %c0_52, %c0_53] : memref<9x24x1xf32, #tpu.memory_space<vmem>>, vector<1x24x1xf32>
    %102 = vector.shape_cast %101 : vector<1x24x1xf32> to vector<24x1xf32>
    %103 = vector.broadcast %102 : vector<24x1xf32> to vector<24x256xf32>
    %104 = arith.mulf %100, %103 : vector<24x256xf32>
    %105 = arith.addf %95, %104 : vector<24x256xf32>
    %c239_i32 = arith.constant 239 : i32
    %106 = tpu.dynamic_rotate %27 by %c239_i32 dim 1 : vector<24x256xf32>, i32 -> vector<24x256xf32>
    %c8 = arith.constant 8 : index
    %c0_54 = arith.constant 0 : index
    %c0_55 = arith.constant 0 : index
    %107 = vector.load %arg6[%c8, %c0_54, %c0_55] : memref<9x1x256xf32, #tpu.memory_space<vmem>>, vector<1x1x256xf32>
    %108 = vector.shape_cast %107 : vector<1x1x256xf32> to vector<1x256xf32>
    %109 = vector.broadcast %108 : vector<1x256xf32> to vector<24x256xf32>
    %110 = arith.mulf %106, %109 : vector<24x256xf32>
    %c8_56 = arith.constant 8 : index
    %c0_57 = arith.constant 0 : index
    %c0_58 = arith.constant 0 : index
    %111 = vector.load %arg5[%c8_56, %c0_57, %c0_58] : memref<9x24x1xf32, #tpu.memory_space<vmem>>, vector<1x24x1xf32>
    %112 = vector.shape_cast %111 : vector<1x24x1xf32> to vector<24x1xf32>
    %113 = vector.broadcast %112 : vector<24x1xf32> to vector<24x256xf32>
    %114 = arith.mulf %110, %113 : vector<24x256xf32>
    %115 = arith.addf %105, %114 : vector<24x256xf32>
    %116 = vector.extract_strided_slice %115 {offsets = [0, 0], sizes = [16, 256], strides = [1, 1]} : vector<24x256xf32> to vector<16x256xf32>
    %c0_59 = arith.constant 0 : index
    %c0_60 = arith.constant 0 : index
    %117 = vector.load %arg7[%c0_59, %c0_60] : memref<256x512xf32, #tpu.memory_space<vmem>>, vector<256x512xf32>
    %cst_61 = arith.constant dense<0.000000e+00> : vector<16x512xf32>
    %118 = tpu.matmul %116, %117, %cst_61 {dimension_numbers = #tpu.dot_dimension_numbers<[1], [0], [0], [1], [0, 0, 1, 1], [], []>} : vector<16x256xf32>, vector<256x512xf32>, vector<16x512xf32> -> vector<16x512xf32>
    %119 = vector.extract_strided_slice %118 {offsets = [0, 0], sizes = [8, 256], strides = [1, 1]} : vector<16x512xf32> to vector<8x256xf32>
    %120 = vector.extract_strided_slice %118 {offsets = [0, 256], sizes = [8, 256], strides = [1, 1]} : vector<16x512xf32> to vector<8x256xf32>
    %121 = vector.extract_strided_slice %118 {offsets = [8, 0], sizes = [8, 256], strides = [1, 1]} : vector<16x512xf32> to vector<8x256xf32>
    %122 = vector.extract_strided_slice %118 {offsets = [8, 256], sizes = [8, 256], strides = [1, 1]} : vector<16x512xf32> to vector<8x256xf32>
    %123 = arith.mulf %119, %121 : vector<8x256xf32>
    %124 = arith.mulf %120, %122 : vector<8x256xf32>
    %125 = arith.subf %123, %124 : vector<8x256xf32>
    %126 = arith.mulf %119, %122 : vector<8x256xf32>
    %127 = arith.mulf %120, %121 : vector<8x256xf32>
    %128 = arith.addf %126, %127 : vector<8x256xf32>
    %129 = tpu.concatenate %125, %128 in 1 : vector<8x256xf32>, vector<8x256xf32> -> vector<8x512xf32>
    %c0_62 = arith.constant 0 : index
    %c0_63 = arith.constant 0 : index
    %130 = vector.load %arg8[%c0_62, %c0_63] : memref<512x256xf32, #tpu.memory_space<vmem>>, vector<512x256xf32>
    %cst_64 = arith.constant dense<0.000000e+00> : vector<8x256xf32>
    %131 = tpu.matmul %129, %130, %cst_64 {dimension_numbers = #tpu.dot_dimension_numbers<[1], [0], [0], [1], [0, 0, 1, 1], [], []>} : vector<8x512xf32>, vector<512x256xf32>, vector<8x256xf32> -> vector<8x256xf32>
    %cst_65 = arith.constant dense<0.000000e+00> : vector<256xf32>
    %132 = vector.multi_reduction <add>, %131, %cst_65 [0] : vector<8x256xf32> to vector<256xf32>
    %133 = vector.shape_cast %132 : vector<256xf32> to vector<1x256xf32>
    %cst_66 = arith.constant 8.000000e+00 : f32
    %134 = vector.broadcast %cst_66 : f32 to vector<1x256xf32>
    %135 = arith.divf %133, %134 : vector<1x256xf32>
    %136 = vector.broadcast %135 : vector<1x256xf32> to vector<8x256xf32>
    %137 = arith.subf %131, %136 : vector<8x256xf32>
    %138 = arith.mulf %137, %137 : vector<8x256xf32>
    %cst_67 = arith.constant dense<0.000000e+00> : vector<256xf32>
    %139 = vector.multi_reduction <add>, %138, %cst_67 [0] : vector<8x256xf32> to vector<256xf32>
    %140 = vector.shape_cast %139 : vector<256xf32> to vector<1x256xf32>
    %cst_68 = arith.constant 8.000000e+00 : f32
    %141 = vector.broadcast %cst_68 : f32 to vector<1x256xf32>
    %142 = arith.divf %140, %141 : vector<1x256xf32>
    %143 = vector.broadcast %135 : vector<1x256xf32> to vector<8x256xf32>
    %144 = arith.subf %131, %143 : vector<8x256xf32>
    %cst_69 = arith.constant 9.99999974E-6 : f32
    %145 = vector.broadcast %cst_69 : f32 to vector<1x256xf32>
    %146 = arith.addf %142, %145 : vector<1x256xf32>
    %147 = math.rsqrt %146 : vector<1x256xf32>
    %148 = vector.broadcast %147 : vector<1x256xf32> to vector<8x256xf32>
    %149 = arith.mulf %144, %148 : vector<8x256xf32>
    %c0_70 = arith.constant 0 : index
    %c0_71 = arith.constant 0 : index
    %150 = vector.load %arg9[%c0_70, %c0_71] : memref<8x1xf32, #tpu.memory_space<vmem>>, vector<8x1xf32>
    %151 = vector.broadcast %150 : vector<8x1xf32> to vector<8x256xf32>
    %152 = arith.mulf %149, %151 : vector<8x256xf32>
    %c0_72 = arith.constant 0 : index
    %c0_73 = arith.constant 0 : index
    %153 = vector.load %arg10[%c0_72, %c0_73] : memref<8x1xf32, #tpu.memory_space<vmem>>, vector<8x1xf32>
    %154 = vector.broadcast %153 : vector<8x1xf32> to vector<8x256xf32>
    %155 = arith.addf %152, %154 : vector<8x256xf32>
    %156 = vector.extract_strided_slice %115 {offsets = [16, 0], sizes = [8, 256], strides = [1, 1]} : vector<24x256xf32> to vector<8x256xf32>
    %157 = arith.mulf %156, %155 : vector<8x256xf32>
    %c0_74 = arith.constant 0 : index
    %c0_75 = arith.constant 0 : index
    %158 = vector.load %arg11[%c0_74, %c0_75] : memref<4x8xf32, #tpu.memory_space<vmem>>, vector<4x8xf32>
    %cst_76 = arith.constant dense<0.000000e+00> : vector<4x256xf32>
    %159 = tpu.matmul %158, %157, %cst_76 {dimension_numbers = #tpu.dot_dimension_numbers<[1], [0], [0], [1], [0, 0, 1, 1], [], []>} : vector<4x8xf32>, vector<8x256xf32>, vector<4x256xf32> -> vector<4x256xf32>
    %160 = arith.addf %1, %159 : vector<4x256xf32>
    %c0_77 = arith.constant 0 : index
    %c0_78 = arith.constant 0 : index
    %c0_79 = arith.constant 0 : index
    %161 = vector.load %arg12[%c0_77, %c0_78, %c0_79] : memref<1x4x256xf32, #tpu.memory_space<vmem>>, vector<1x4x256xf32>
    %162 = vector.shape_cast %161 : vector<1x4x256xf32> to vector<4x256xf32>
    %163 = vector.shape_cast %160 : vector<4x256xf32> to vector<1x4x256xf32>
    tpu.vector_store %arg12[%c0_77, %c0_78, %c0_79], %163 {strides = array<i32>} : memref<1x4x256xf32, #tpu.memory_space<vmem>>, vector<1x4x256xf32>,
    return
  }
  func.func @transform_0(%arg0: i32) -> (i32, i32, i32) {
    %c0_i32 = arith.constant 0 : i32
    %c0_i32_0 = arith.constant 0 : i32
    %c0_i32_1 = arith.constant 0 : i32
    return %arg0, %c0_i32, %c0_i32_0 : i32, i32, i32
  }
  func.func @transform_1(%arg0: i32) -> (i32, i32) {
    %c0_i32 = arith.constant 0 : i32
    %c0_i32_0 = arith.constant 0 : i32
    %c0_i32_1 = arith.constant 0 : i32
    return %c0_i32, %c0_i32_0 : i32, i32
  }
  func.func @transform_2(%arg0: i32) -> (i32, i32) {
    %c0_i32 = arith.constant 0 : i32
    %c0_i32_0 = arith.constant 0 : i32
    %c0_i32_1 = arith.constant 0 : i32
    return %c0_i32, %c0_i32_0 : i32, i32
  }
  func.func @transform_3(%arg0: i32) -> (i32, i32) {
    %c0_i32 = arith.constant 0 : i32
    %c0_i32_0 = arith.constant 0 : i32
    %c0_i32_1 = arith.constant 0 : i32
    return %c0_i32, %c0_i32_0 : i32, i32
  }
  func.func @transform_4(%arg0: i32) -> (i32, i32, i32) {
    %c0_i32 = arith.constant 0 : i32
    %c0_i32_0 = arith.constant 0 : i32
    %c0_i32_1 = arith.constant 0 : i32
    %c0_i32_2 = arith.constant 0 : i32
    return %c0_i32, %c0_i32_0, %c0_i32_1 : i32, i32, i32
  }
  func.func @transform_5(%arg0: i32) -> (i32, i32, i32) {
    %c0_i32 = arith.constant 0 : i32
    %c0_i32_0 = arith.constant 0 : i32
    %c0_i32_1 = arith.constant 0 : i32
    %c0_i32_2 = arith.constant 0 : i32
    return %c0_i32, %c0_i32_0, %c0_i32_1 : i32, i32, i32
  }
  func.func @transform_6(%arg0: i32) -> (i32, i32) {
    %c0_i32 = arith.constant 0 : i32
    %c0_i32_0 = arith.constant 0 : i32
    %c0_i32_1 = arith.constant 0 : i32
    return %c0_i32, %c0_i32_0 : i32, i32
  }
  func.func @transform_7(%arg0: i32) -> (i32, i32) {
    %c0_i32 = arith.constant 0 : i32
    %c0_i32_0 = arith.constant 0 : i32
    %c0_i32_1 = arith.constant 0 : i32
    return %c0_i32, %c0_i32_0 : i32, i32
  }
  func.func @transform_8(%arg0: i32) -> (i32, i32) {
    %c0_i32 = arith.constant 0 : i32
    %c0_i32_0 = arith.constant 0 : i32
    %c0_i32_1 = arith.constant 0 : i32
    return %c0_i32, %c0_i32_0 : i32, i32
  }
  func.func @transform_9(%arg0: i32) -> (i32, i32) {
    %c0_i32 = arith.constant 0 : i32
    %c0_i32_0 = arith.constant 0 : i32
    %c0_i32_1 = arith.constant 0 : i32
    return %c0_i32, %c0_i32_0 : i32, i32
  }
  func.func @transform_10(%arg0: i32) -> (i32, i32) {
    %c0_i32 = arith.constant 0 : i32
    %c0_i32_0 = arith.constant 0 : i32
    %c0_i32_1 = arith.constant 0 : i32
    return %c0_i32, %c0_i32_0 : i32, i32
  }
  func.func @transform_11(%arg0: i32) -> (i32, i32, i32) {
    %c0_i32 = arith.constant 0 : i32
    %c0_i32_0 = arith.constant 0 : i32
    %c0_i32_1 = arith.constant 0 : i32
    return %arg0, %c0_i32, %c0_i32_0 : i32, i32, i32
  }
}

</mosaic_0001>

<llo_original>
// kernel: tpu_custom_call.1
$region0: #{tpu_custom_call.1}
  #allocation0 [shape = 'u32[]', space=smem, size = 0x4, offset = 0x4, fixed_abs, tag = 'smem constant byte address 0x4 - core index']
  #allocation1 [shape = 'u32[144,128]{1,0:T(1,128)}', space=vmem, size = 0x12000, scoped, tag = 'internal scratch']
  %s0 = inlined_call_operand.vmem [shape: f32[2,4,256], index: 0, kind: input, shape index: {}]
  %s1 = inlined_call_operand.vmem [shape: f32[4,1], index: 1, kind: input, shape index: {}]
  %s2 = inlined_call_operand.vmem [shape: f32[4,1], index: 2, kind: input, shape index: {}]
  %s3 = inlined_call_operand.vmem [shape: f32[24,4], index: 3, kind: input, shape index: {}]
  %s4 = inlined_call_operand.vmem [shape: f32[9,24,1], index: 4, kind: input, shape index: {}]
  %s5 = inlined_call_operand.vmem [shape: f32[9,1,256], index: 5, kind: input, shape index: {}]
  %s6 = inlined_call_operand.hbm [shape: f32[256,512], index: 6, kind: input, shape index: {}]
  %s7 = inlined_call_operand.hbm [shape: f32[512,256], index: 7, kind: input, shape index: {}]
  %s8 = inlined_call_operand.vmem [shape: f32[8,1], index: 8, kind: input, shape index: {}]
  %s9 = inlined_call_operand.vmem [shape: f32[8,1], index: 9, kind: input, shape index: {}]
  %s10 = inlined_call_operand.vmem [shape: f32[4,8], index: 10, kind: input, shape index: {}]
  %s11 = inlined_call_operand.hbm [shape: f32[2,4,256], index: 11, kind: output, shape index: {}]
  %s12 = sld [smem:[#allocation0]]
  $region85: #{tpu_custom_call.1} parent=0
    _
  %s14 = ssub.s32 1, %s12
  %s15 = scalar_select 0, %s14, %s12
  $region1: #{tpu_custom_call.1} parent=0
    #allocation2 [shape = 'u8[524288]{0}', space=vmem, size = 0x80000, scoped, tag = 'input window, operand 6, single buffered']
    #allocation3 [shape = 's32[2]{0}', space=sflag, size = 0x8, scoped, tag = 'scoped memory for tpu_custom_call.1']
    #allocation4 [shape = 's32[2]{0}', space=sflag, size = 0x8, scoped, tag = 'scoped memory for tpu_custom_call.1']
    #allocation5 [shape = 'u8[524288]{0}', space=vmem, size = 0x80000, scoped, tag = 'input window, operand 7, single buffered']
    #allocation6 [shape = 's32[1]{0}', space=sflag, size = 0x4, scoped, tag = 'scoped memory for tpu_custom_call.1']
    #allocation7 [shape = 'u8[8192]{0}', space=vmem, size = 0x2000, scoped, tag = 'output window, operand 0']
    %16 = vsyncpa [#allocation3], 0
    %17 = vsyncpa [#allocation6], 0
    %18 = vsyncpa [#allocation4], 0
    %s19 = scalar_lea.sflag [#allocation4], 1
    %20 = vsyncpa %s19, 0
    loop: start=0, step=1, limit=4
    $region2: #{tpu_custom_call.1} parent=1 // loop_pre_header
      _
    $region3: #{tpu_custom_call.1} parent=1 // loop_header
      %s22 = sphi 0, %s26
      %p23 = scmp.ge.s32.totalorder %s22, 4
      %s32 = sphi 0, %s34
      %s35 = sphi 0, %s32
      %s36 = sphi 0, %s35
      %s52 = sphi 0, %s36
      %s56 = sphi 0, %s56
      %s58 = sphi 0, %s56
      %s59 = sphi 0, %s58
      %s73 = sphi 0, %s59
      %s77 = sphi 0, %s77
      %s79 = sphi 0, %s77
      %s80 = sphi 0, %s79
      %s94 = sphi 0, %s80
      %s98 = sphi 0, %s98
      %s100 = sphi 0, %s98
      %s101 = sphi 0, %s100
      %s115 = sphi 0, %s101
      %s119 = sphi 0, %s119
      %s121 = sphi 0, %s119
      %s122 = sphi 0, %s121
      %s136 = sphi 0, %s122
      %s140 = sphi 0, %s140
      %s142 = sphi 0, %s140
      %s143 = sphi 0, %s142
      %s157 = sphi 0, %s143
      %s161 = sphi 0, %s161
      %s163 = sphi 0, %s161
      %s164 = sphi 0, %s163
      %s178 = sphi 0, %s164
      %s182 = sphi 0, %s182
      %s184 = sphi 0, %s182
      %s185 = sphi 0, %s184
      %s199 = sphi 0, %s185
      %s203 = sphi 0, %s203
      %s205 = sphi 0, %s203
      %s206 = sphi 0, %s205
      %s220 = sphi 0, %s206
      %s224 = sphi 0, %s224
      %s226 = sphi 0, %s224
      %s227 = sphi 0, %s226
      %s241 = sphi 0, %s227
      %s245 = sphi 0, %s245
      %s247 = sphi 0, %s245
      %s248 = sphi 0, %s247
      %s262 = sphi 0, %s248
      %s268 = sphi 0, %s270
      %s271 = sphi 0, %s268
      %s272 = sphi 0, %s271
      %s288 = sphi 0, %s272
    $region4: #{tpu_custom_call.1} parent=1 // loop_header_branch
      %25 = sbr.rel (%p23) target = $region8
    $region5: #{tpu_custom_call.1} parent=1 // loop_body
      %s27 = ssub.s32 %s22, 1
      %s28 = ssub.s32 %s22, 2
      %s29 = sadd.s32 %s22, 1
      %s30 = ssub.s32 %s22, %s29
      %p31 = scmp.eq.s32.totalorder %s30, 0
      %s33 = sadd.s32 %s32, 1
      %s34 = scalar_select %p31, %s32, %s33
      %p37 = pneg %p31
      %p38 = scmp.eq.s32.totalorder %s22, 1
      %p39 = por %p37, %p38
      %p40 = scmp.ne.s32.totalorder %s32, %s35
      %p41 = scmp.eq.s32.totalorder %s22, 0
      %p42 = por %p40, %p41
      %p43 = scmp.ne.s32.totalorder %s32, %s35
      %p44 = scmp.eq.s32.totalorder %s27, 1
      %p45 = por %p43, %p44
      %p46 = scmp.ne.s32.totalorder %s35, %s36
      %p47 = scmp.eq.s32.totalorder %s27, 0
      %p48 = por %p46, %p47
      %p49 = scmp.ne.s32.totalorder %s35, %s36
      %p50 = scmp.eq.s32.totalorder %s28, 1
      %p51 = por %p49, %p50
      %p53 = scmp.ne.s32.totalorder %s36, %s52
      %p54 = scmp.eq.s32.totalorder %s28, 0
      %p55 = por %p53, %p54
      %s57 = sadd.s32 %s56, 1
      %p60 = scmp.eq.s32.totalorder %s22, 1
      %p61 = scmp.ne.s32.totalorder %s56, %s58
      %p62 = scmp.eq.s32.totalorder %s22, 0
      %p63 = por %p61, %p62
      %p64 = scmp.ne.s32.totalorder %s56, %s58
      %p65 = scmp.eq.s32.totalorder %s27, 1
      %p66 = por %p64, %p65
      %p67 = scmp.ne.s32.totalorder %s58, %s59
      %p68 = scmp.eq.s32.totalorder %s27, 0
      %p69 = por %p67, %p68
      %p70 = scmp.ne.s32.totalorder %s58, %s59
      %p71 = scmp.eq.s32.totalorder %s28, 1
      %p72 = por %p70, %p71
      %p74 = scmp.ne.s32.totalorder %s59, %s73
      %p75 = scmp.eq.s32.totalorder %s28, 0
      %p76 = por %p74, %p75
      %s78 = sadd.s32 %s77, 1
      %p81 = scmp.eq.s32.totalorder %s22, 1
      %p82 = scmp.ne.s32.totalorder %s77, %s79
      %p83 = scmp.eq.s32.totalorder %s22, 0
      %p84 = por %p82, %p83
      %p85 = scmp.ne.s32.totalorder %s77, %s79
      %p86 = scmp.eq.s32.totalorder %s27, 1
      %p87 = por %p85, %p86
      %p88 = scmp.ne.s32.totalorder %s79, %s80
      %p89 = scmp.eq.s32.totalorder %s27, 0
      %p90 = por %p88, %p89
      %p91 = scmp.ne.s32.totalorder %s79, %s80
      %p92 = scmp.eq.s32.totalorder %s28, 1
      %p93 = por %p91, %p92
      %p95 = scmp.ne.s32.totalorder %s80, %s94
      %p96 = scmp.eq.s32.totalorder %s28, 0
      %p97 = por %p95, %p96
      %s99 = sadd.s32 %s98, 1
      %p102 = scmp.eq.s32.totalorder %s22, 1
      %p103 = scmp.ne.s32.totalorder %s98, %s100
      %p104 = scmp.eq.s32.totalorder %s22, 0
      %p105 = por %p103, %p104
      %p106 = scmp.ne.s32.totalorder %s98, %s100
      %p107 = scmp.eq.s32.totalorder %s27, 1
      %p108 = por %p106, %p107
      %p109 = scmp.ne.s32.totalorder %s100, %s101
      %p110 = scmp.eq.s32.totalorder %s27, 0
      %p111 = por %p109, %p110
      %p112 = scmp.ne.s32.totalorder %s100, %s101
      %p113 = scmp.eq.s32.totalorder %s28, 1
      %p114 = por %p112, %p113
      %p116 = scmp.ne.s32.totalorder %s101, %s115
      %p117 = scmp.eq.s32.totalorder %s28, 0
      %p118 = por %p116, %p117
      %s120 = sadd.s32 %s119, 1
      %p123 = scmp.eq.s32.totalorder %s22, 1
      %p124 = scmp.ne.s32.totalorder %s119, %s121
      %p125 = scmp.eq.s32.totalorder %s22, 0
      %p126 = por %p124, %p125
      %p127 = scmp.ne.s32.totalorder %s119, %s121
      %p128 = scmp.eq.s32.totalorder %s27, 1
      %p129 = por %p127, %p128
      %p130 = scmp.ne.s32.totalorder %s121, %s122
      %p131 = scmp.eq.s32.totalorder %s27, 0
      %p132 = por %p130, %p131
      %p133 = scmp.ne.s32.totalorder %s121, %s122
      %p134 = scmp.eq.s32.totalorder %s28, 1
      %p135 = por %p133, %p134
      %p137 = scmp.ne.s32.totalorder %s122, %s136
      %p138 = scmp.eq.s32.totalorder %s28, 0
      %p139 = por %p137, %p138
      %s141 = sadd.s32 %s140, 1
      %p144 = scmp.eq.s32.totalorder %s22, 1
      %p145 = scmp.ne.s32.totalorder %s140, %s142
      %p146 = scmp.eq.s32.totalorder %s22, 0
      %p147 = por %p145, %p146
      %p148 = scmp.ne.s32.totalorder %s140, %s142
      %p149 = scmp.eq.s32.totalorder %s27, 1
      %p150 = por %p148, %p149
      %p151 = scmp.ne.s32.totalorder %s142, %s143
      %p152 = scmp.eq.s32.totalorder %s27, 0
      %p153 = por %p151, %p152
      %p154 = scmp.ne.s32.totalorder %s142, %s143
      %p155 = scmp.eq.s32.totalorder %s28, 1
      %p156 = por %p154, %p155
      %p158 = scmp.ne.s32.totalorder %s143, %s157
      %p159 = scmp.eq.s32.totalorder %s28, 0
      %p160 = por %p158, %p159
      %s162 = sadd.s32 %s161, 1
      %p165 = scmp.eq.s32.totalorder %s22, 1
      %p166 = scmp.ne.s32.totalorder %s161, %s163
      %p167 = scmp.eq.s32.totalorder %s22, 0
      %p168 = por %p166, %p167
      %p169 = scmp.ne.s32.totalorder %s161, %s163
      %p170 = scmp.eq.s32.totalorder %s27, 1
      %p171 = por %p169, %p170
      %p172 = scmp.ne.s32.totalorder %s163, %s164
      %p173 = scmp.eq.s32.totalorder %s27, 0
      %p174 = por %p172, %p173
      %p175 = scmp.ne.s32.totalorder %s163, %s164
      %p176 = scmp.eq.s32.totalorder %s28, 1
      %p177 = por %p175, %p176
      %p179 = scmp.ne.s32.totalorder %s164, %s178
      %p180 = scmp.eq.s32.totalorder %s28, 0
      %p181 = por %p179, %p180
      %s183 = sadd.s32 %s182, 1
      %p186 = scmp.eq.s32.totalorder %s22, 1
      %p187 = scmp.ne.s32.totalorder %s182, %s184
      %p188 = scmp.eq.s32.totalorder %s22, 0
      %p189 = por %p187, %p188
      %p190 = scmp.ne.s32.totalorder %s182, %s184
      %p191 = scmp.eq.s32.totalorder %s27, 1
      %p192 = por %p190, %p191
      %p193 = scmp.ne.s32.totalorder %s184, %s185
      %p194 = scmp.eq.s32.totalorder %s27, 0
      %p195 = por %p193, %p194
      %p196 = scmp.ne.s32.totalorder %s184, %s185
      %p197 = scmp.eq.s32.totalorder %s28, 1
      %p198 = por %p196, %p197
      %p200 = scmp.ne.s32.totalorder %s185, %s199
      %p201 = scmp.eq.s32.totalorder %s28, 0
      %p202 = por %p200, %p201
      %s204 = sadd.s32 %s203, 1
      %p207 = scmp.eq.s32.totalorder %s22, 1
      %p208 = scmp.ne.s32.totalorder %s203, %s205
      %p209 = scmp.eq.s32.totalorder %s22, 0
      %p210 = por %p208, %p209
      %p211 = scmp.ne.s32.totalorder %s203, %s205
      %p212 = scmp.eq.s32.totalorder %s27, 1
      %p213 = por %p211, %p212
      %p214 = scmp.ne.s32.totalorder %s205, %s206
      %p215 = scmp.eq.s32.totalorder %s27, 0
      %p216 = por %p214, %p215
      %p217 = scmp.ne.s32.totalorder %s205, %s206
      %p218 = scmp.eq.s32.totalorder %s28, 1
      %p219 = por %p217, %p218
      %p221 = scmp.ne.s32.totalorder %s206, %s220
      %p222 = scmp.eq.s32.totalorder %s28, 0
      %p223 = por %p221, %p222
      %s225 = sadd.s32 %s224, 1
      %p228 = scmp.eq.s32.totalorder %s22, 1
      %p229 = scmp.ne.s32.totalorder %s224, %s226
      %p230 = scmp.eq.s32.totalorder %s22, 0
      %p231 = por %p229, %p230
      %p232 = scmp.ne.s32.totalorder %s224, %s226
      %p233 = scmp.eq.s32.totalorder %s27, 1
      %p234 = por %p232, %p233
      %p235 = scmp.ne.s32.totalorder %s226, %s227
      %p236 = scmp.eq.s32.totalorder %s27, 0
      %p237 = por %p235, %p236
      %p238 = scmp.ne.s32.totalorder %s226, %s227
      %p239 = scmp.eq.s32.totalorder %s28, 1
      %p240 = por %p238, %p239
      %p242 = scmp.ne.s32.totalorder %s227, %s241
      %p243 = scmp.eq.s32.totalorder %s28, 0
      %p244 = por %p242, %p243
      %s246 = sadd.s32 %s245, 1
      %p249 = scmp.eq.s32.totalorder %s22, 1
      %p250 = scmp.ne.s32.totalorder %s245, %s247
      %p251 = scmp.eq.s32.totalorder %s22, 0
      %p252 = por %p250, %p251
      %p253 = scmp.ne.s32.totalorder %s245, %s247
      %p254 = scmp.eq.s32.totalorder %s27, 1
      %p255 = por %p253, %p254
      %p256 = scmp.ne.s32.totalorder %s247, %s248
      %p257 = scmp.eq.s32.totalorder %s27, 0
      %p258 = por %p256, %p257
      %p259 = scmp.ne.s32.totalorder %s247, %s248
      %p260 = scmp.eq.s32.totalorder %s28, 1
      %p261 = por %p259, %p260
      %p263 = scmp.ne.s32.totalorder %s248, %s262
      %p264 = scmp.eq.s32.totalorder %s28, 0
      %p265 = por %p263, %p264
      %s266 = ssub.s32 %s22, %s29
      %p267 = scmp.eq.s32.totalorder %s266, 0
      %s269 = sadd.s32 %s268, 1
      %s270 = scalar_select %p267, %s268, %s269
      %p273 = pneg %p267
      %p274 = scmp.eq.s32.totalorder %s22, 1
      %p275 = por %p273, %p274
      %p276 = scmp.ne.s32.totalorder %s268, %s271
      %p277 = scmp.eq.s32.totalorder %s22, 0
      %p278 = por %p276, %p277
      %p279 = scmp.ne.s32.totalorder %s268, %s271
      %p280 = scmp.eq.s32.totalorder %s27, 1
      %p281 = por %p279, %p280
      %p282 = scmp.ne.s32.totalorder %s271, %s272
      %p283 = scmp.eq.s32.totalorder %s27, 0
      %p284 = por %p282, %p283
      %p285 = scmp.ne.s32.totalorder %s271, %s272
      %p286 = scmp.eq.s32.totalorder %s28, 1
      %p287 = por %p285, %p286
      %p289 = scmp.ne.s32.totalorder %s272, %s288
      %p290 = scmp.eq.s32.totalorder %s28, 0
      %p291 = por %p289, %p290
      %p292 = scmp.le.s32.totalorder 1, %s22
      %p293 = scmp.lt.s32.totalorder %s22, 3
      %p294 = pnand %p292, %p293
      %p295 = pneg %p294
      // Predicated region
      $region9: #{tpu_custom_call.1} parent=5 // pred_check
        _
      $region10: #{tpu_custom_call.1} parent=5 // pred_check_branch
        %297 = sbr.rel (%p294) target = $region12
      $region11: #{tpu_custom_call.1} parent=5 // pred_region
        %s298 = ssub.s32 %s22, 1
        // Predicated region
        $region13: #{tpu_custom_call.1} parent=11 // pred_check
          %p299 = pneg %p69
        $region14: #{tpu_custom_call.1} parent=11 // pred_check_branch
          %301 = sbr.rel (%p299) target = $region16
        $region15: #{tpu_custom_call.1} parent=11 // pred_region
          _
        $region16: #{tpu_custom_call.1} parent=11 // pred_fallthru
          _
        // Predicated region
        $region17: #{tpu_custom_call.1} parent=11 // pred_check
          %p302 = pneg %p90
        $region18: #{tpu_custom_call.1} parent=11 // pred_check_branch
          %304 = sbr.rel (%p302) target = $region20
        $region19: #{tpu_custom_call.1} parent=11 // pred_region
          _
        $region20: #{tpu_custom_call.1} parent=11 // pred_fallthru
          _
        // Predicated region
        $region21: #{tpu_custom_call.1} parent=11 // pred_check
          %p305 = pneg %p111
        $region22: #{tpu_custom_call.1} parent=11 // pred_check_branch
          %307 = sbr.rel (%p305) target = $region24
        $region23: #{tpu_custom_call.1} parent=11 // pred_region
          _
        $region24: #{tpu_custom_call.1} parent=11 // pred_fallthru
          _
        // Predicated region
        $region25: #{tpu_custom_call.1} parent=11 // pred_check
          %p308 = pneg %p132
        $region26: #{tpu_custom_call.1} parent=11 // pred_check_branch
          %310 = sbr.rel (%p308) target = $region28
        $region27: #{tpu_custom_call.1} parent=11 // pred_region
          _
        $region28: #{tpu_custom_call.1} parent=11 // pred_fallthru
          _
        // Predicated region
        $region29: #{tpu_custom_call.1} parent=11 // pred_check
          %p311 = pneg %p153
        $region30: #{tpu_custom_call.1} parent=11 // pred_check_branch
          %313 = sbr.rel (%p311) target = $region32
        $region31: #{tpu_custom_call.1} parent=11 // pred_region
          _
        $region32: #{tpu_custom_call.1} parent=11 // pred_fallthru
          _
        // Predicated region
        $region33: #{tpu_custom_call.1} parent=11 // pred_check
          %p314 = pneg %p174
        $region34: #{tpu_custom_call.1} parent=11 // pred_check_branch
          %316 = sbr.rel (%p314) target = $region36
        $region35: #{tpu_custom_call.1} parent=11 // pred_region
          %s318 = ssub.s32 16384, 16384
          %319 = vsyncadd [#allocation3], %s318
          %s320 = sshll.u32 [#allocation2], 4
          %s321 = int_to_ptr.vmem [resolvable:$true] %s320
          %326 = dma.hbm_to_vmem [thread:$0]  %s6, 16384, %s321, [#allocation3], 512, 512, 32
        $region36: #{tpu_custom_call.1} parent=11 // pred_fallthru
          _
        // Predicated region
        $region37: #{tpu_custom_call.1} parent=11 // pred_check
          %p327 = pneg %p195
        $region38: #{tpu_custom_call.1} parent=11 // pred_check_branch
          %329 = sbr.rel (%p327) target = $region40
        $region39: #{tpu_custom_call.1} parent=11 // pred_region
          %s331 = ssub.s32 16384, 16384
          %332 = vsyncadd [#allocation6], %s331
          %s333 = sshll.u32 [#allocation5], 4
          %s334 = int_to_ptr.vmem [resolvable:$true] %s333
          %339 = dma.hbm_to_vmem [thread:$0]  %s7, 16384, %s334, [#allocation6], 256, 256, 16
        $region40: #{tpu_custom_call.1} parent=11 // pred_fallthru
          _
        // Predicated region
        $region41: #{tpu_custom_call.1} parent=11 // pred_check
          %p340 = pneg %p216
        $region42: #{tpu_custom_call.1} parent=11 // pred_check_branch
          %342 = sbr.rel (%p340) target = $region44
        $region43: #{tpu_custom_call.1} parent=11 // pred_region
          _
        $region44: #{tpu_custom_call.1} parent=11 // pred_fallthru
          _
        // Predicated region
        $region45: #{tpu_custom_call.1} parent=11 // pred_check
          %p343 = pneg %p237
        $region46: #{tpu_custom_call.1} parent=11 // pred_check_branch
          %345 = sbr.rel (%p343) target = $region48
        $region47: #{tpu_custom_call.1} parent=11 // pred_region
          _
        $region48: #{tpu_custom_call.1} parent=11 // pred_fallthru
          _
        // Predicated region
        $region49: #{tpu_custom_call.1} parent=11 // pred_check
          %p346 = pneg %p258
        $region50: #{tpu_custom_call.1} parent=11 // pred_check_branch
          %348 = sbr.rel (%p346) target = $region52
        $region51: #{tpu_custom_call.1} parent=11 // pred_region
          _
        $region52: #{tpu_custom_call.1} parent=11 // pred_fallthru
          _
      $region12: #{tpu_custom_call.1} parent=5 // pred_fallthru
        _
      %p349 = scmp.lt.s32.totalorder %s22, 2
      // Predicated region
      $region53: #{tpu_custom_call.1} parent=5 // pred_check
        %p350 = pneg %p349
      $region54: #{tpu_custom_call.1} parent=5 // pred_check_branch
        %352 = sbr.rel (%p350) target = $region56
      $region55: #{tpu_custom_call.1} parent=5 // pred_region
        // Predicated region
        $region57: #{tpu_custom_call.1} parent=55 // pred_check
          %p353 = pneg %p42
        $region58: #{tpu_custom_call.1} parent=55 // pred_check_branch
          %355 = sbr.rel (%p353) target = $region60
        $region59: #{tpu_custom_call.1} parent=55 // pred_region
          %p356 = scmp.lt.s32.totalorder %s22, 1
          %s357 = scalar_select %p356, %s22, 1
          %s358 = smul.addr %s357, 2
          %s359 = smul.addr %s358, 4
          %s360 = scalar_lea.vmem %s0, %s359
        $region60: #{tpu_custom_call.1} parent=55 // pred_fallthru
          _
      $region56: #{tpu_custom_call.1} parent=5 // pred_fallthru
        _
      %p361 = scmp.le.s32.totalorder 1, %s22
      %p362 = scmp.lt.s32.totalorder %s22, 3
      %p363 = pnand %p361, %p362
      %p364 = pneg %p363
      // Predicated region
      $region61: #{tpu_custom_call.1} parent=5 // pred_check
        _
      $region62: #{tpu_custom_call.1} parent=5 // pred_check_branch
        %366 = sbr.rel (%p363) target = $region64
      $region63: #{tpu_custom_call.1} parent=5 // pred_region
        %s367 = ssub.s32 %s22, 1
        // Predicated region
        $region65: #{tpu_custom_call.1} parent=63 // pred_check
          %p368 = pneg %p174
        $region66: #{tpu_custom_call.1} parent=63 // pred_check_branch
          %370 = sbr.rel (%p368) target = $region68
        $region67: #{tpu_custom_call.1} parent=63 // pred_region
          %371 = dma.done [#allocation3], 16384
        $region68: #{tpu_custom_call.1} parent=63 // pred_fallthru
          _
        // Predicated region
        $region69: #{tpu_custom_call.1} parent=63 // pred_check
          %p372 = pneg %p195
        $region70: #{tpu_custom_call.1} parent=63 // pred_check_branch
          %374 = sbr.rel (%p372) target = $region72
        $region71: #{tpu_custom_call.1} parent=63 // pred_region
          %375 = dma.done [#allocation6], 16384
        $region72: #{tpu_custom_call.1} parent=63 // pred_fallthru
          _
        %p376 = scmp.lt.s32.totalorder %s27, 1
        %s377 = scalar_select %p376, %s27, 1
        %s378 = smul.addr %s377, 2
        %s379 = smul.addr %s378, 4
        %s380 = scalar_lea.vmem %s0, %s379
        %p381 = pneg %p48
        %p382 = pneg %p45
        %p383 = pneg %p69
        %p384 = pneg %p66
        %p385 = pneg %p90
        %p386 = pneg %p87
        %p387 = pneg %p111
        %p388 = pneg %p108
        %p389 = pneg %p132
        %p390 = pneg %p129
        %p391 = pneg %p153
        %p392 = pneg %p150
        %p393 = pneg %p174
        %p394 = pneg %p171
        %p395 = pneg %p195
        %p396 = pneg %p192
        %p397 = pneg %p216
        %p398 = pneg %p213
        %p399 = pneg %p237
        %p400 = pneg %p234
        %p401 = pneg %p258
        %p402 = pneg %p255
        %p403 = pneg %p284
        %p404 = pneg %p281
        %s405 = sand.u32 %s271, 1
        %s406 = scalar_lea.sflag [#allocation4], %s405
        %s407 = sand.u32 %s271, 1
        %s408 = smul.addr %s407, 8
        %s409 = scalar_lea.vmem [#allocation7], %s408
        %p410 = scmp.lt.s32.totalorder %s27, 1
        %s411 = scalar_select %p410, %s27, 1
        %s412 = smul.addr %s411, 2
        %s413 = smul.addr %s412, 4
        %s414 = scalar_lea.vmem %s0, %s413
        %v415 = vld [vmem:[%s414] sm:$0xff]
        %v417 = vcombine.high %v415, %v415
        %vm419 = vcmask 1043456
        %v420 = vsel %vm419, %v415, 0.0
        %v421 = vrot.slane %v420, 4
        %v422 = vadd.f32 %v420, %v421
        %v423 = vrot.slane %v422, 2
        %v424 = vadd.f32 %v422, %v423
        %v425 = vrot.slane %v424, 1
        %v426 = vadd.f32 %v424, %v425
        %v427 = vsel %vm419, %v417, 0.0
        %v428 = vrot.slane %v427, 4
        %v429 = vadd.f32 %v427, %v428
        %v430 = vrot.slane %v429, 2
        %v431 = vadd.f32 %v429, %v430
        %v432 = vrot.slane %v431, 1
        %v433 = vadd.f32 %v431, %v432
        %v434 = vrcp.pop 4.0
        %v435 = vmul.f32 %v426, %v434
        %v436 = vmul.f32 %v433, %v434
        %v439 = vcombine.low %v435, %v436
        %v441 = vsub.f32 %v415, %v439
        %v442 = vmul.f32 %v441, %v441
        %v444 = vcombine.high %v442, %v442
        %v446 = vsel %vm419, %v442, 0.0
        %v447 = vrot.slane %v446, 4
        %v448 = vadd.f32 %v446, %v447
        %v449 = vrot.slane %v448, 2
        %v450 = vadd.f32 %v448, %v449
        %v451 = vrot.slane %v450, 1
        %v452 = vadd.f32 %v450, %v451
        %v453 = vsel %vm419, %v444, 0.0
        %v454 = vrot.slane %v453, 4
        %v455 = vadd.f32 %v453, %v454
        %v456 = vrot.slane %v455, 2
        %v457 = vadd.f32 %v455, %v456
        %v458 = vrot.slane %v457, 1
        %v459 = vadd.f32 %v457, %v458
        %v460 = vmul.f32 %v452, %v434
        %v461 = vmul.f32 %v459, %v434
        %v462 = vadd.f32 %v460, 1e-05
        %v463 = vadd.f32 %v461, 1e-05
        %v464 = vrsqrt.pop %v462
        %v465 = vrsqrt.pop %v463
        %v468 = vcombine.low %v464, %v465
        %v470 = vmul.f32 %v441, %v468
        %v471 = vld [vmem:[%s1] sm:$0xf]
        %473 = vset.pattern.permute.xlu0 0
        %474 = vperm.xlu0 %473, %v471
        %v475 = vpop.permute.xlu0 %474
        %v477 = vunpack.c.l.s4 839922192
        %v478 = vunpack.c.0.s8 %v477
        %v479 = vlaneseq
        %v480 = vshrl.u32 %v479, 7
        %v481 = vsub.s32 %v478, %v480
        %v482 = vrot.slane %v475, %v481
        %v484 = vmul.f32 %v470, %v482
        %v485 = vld [vmem:[%s2] sm:$0xf]
        %487 = vset.pattern.permute.xlu0 0
        %488 = vperm.xlu0 %487, %v485
        %v489 = vpop.permute.xlu0 %488
        %v491 = vunpack.c.l.s4 839922192
        %v492 = vunpack.c.0.s8 %v491
        %v493 = vlaneseq
        %v494 = vshrl.u32 %v493, 7
        %v495 = vsub.s32 %v492, %v494
        %v496 = vrot.slane %v489, %v495
        %v498 = vadd.f32 %v484, %v496
        %v499 = vld [vmem:[%s3] sm:$0xff]
        %v500 = vld [vmem:[%s3 + $0x8] sm:$0xff]
        %v501 = vld [vmem:[%s3 + $0x10] sm:$0xff]
        %v503 = vcombine.high %v498, %v498
        %vm504 = vcmask 31744
        %v506 = vsel %vm504, %v499, 0
        %v509 = vsel %vm504, %v500, 0
        %v512 = vsel %vm504, %v501, 0
        %v514 = vsel %vm419, %v498, 0
        %v516 = vsel %vm419, %v503, 0
        %518 = vmatprep.subr.mxu0 %v516
        %519 = vmatpush1.msra.mxu0 %v514
        %520 = vmatprep.subr.mxu0 0.0
        %521 = vmatpush1.msra.mxu0 0.0
        %522 = vmatprep.subr.mxu0 0.0
        %523 = vmatpush1.msra.mxu0 0.0
        %524 = vmatprep.subr.mxu0 0.0
        %525 = vmatpush1.msra.mxu0 0.0
        %526 = vmatprep.subr.mxu0 0.0
        %527 = vmatpush1.msra.mxu0 0.0
        %528 = vmatprep.subr.mxu0 0.0
        %529 = vmatpush1.msra.mxu0 0.0
        %530 = vmatprep.subr.mxu0 0.0
        %531 = vmatpush1.msra.mxu0 0.0
        %532 = vmatprep.subr.mxu0 0.0
        %533 = vmatpush1.msra.mxu0 0.0
        %534 = vmatprep.subr.mxu0 0.0
        %535 = vmatpush1.msra.mxu0 0.0
        %536 = vmatprep.subr.mxu0 0.0
        %537 = vmatpush1.msra.mxu0 0.0
        %538 = vmatprep.subr.mxu0 0.0
        %539 = vmatpush1.msra.mxu0 0.0
        %540 = vmatprep.subr.mxu0 0.0
        %541 = vmatpush1.msra.mxu0 0.0
        %542 = vmatprep.subr.mxu0 0.0
        %543 = vmatpush1.msra.mxu0 0.0
        %544 = vmatprep.subr.mxu0 0.0
        %545 = vmatpush1.msra.mxu0 0.0
        %546 = vmatprep.subr.mxu0 0.0
        %547 = vmatpush1.msra.mxu0 0.0
        %548 = vmatprep.subr.mxu0 0.0
        %549 = vmatpush1.msra.mxu0 0.0
        %550 = vmatprep.subr.mxu0 0.0
        %551 = vmatpush1.msra.mxu0 0.0
        %552 = vmatprep.subr.mxu0 0.0
        %553 = vmatpush1.msra.mxu0 0.0
        %554 = vmatprep.subr.mxu0 0.0
        %555 = vmatpush1.msra.mxu0 0.0
        %556 = vmatprep.subr.mxu0 0.0
        %557 = vmatpush1.msra.mxu0 0.0
        %558 = vmatprep.subr.mxu0 0.0
        %559 = vmatpush1.msra.mxu0 0.0
        %560 = vmatprep.subr.mxu0 0.0
        %561 = vmatpush1.msra.mxu0 0.0
        %562 = vmatprep.subr.mxu0 0.0
        %563 = vmatpush1.msra.mxu0 0.0
        %564 = vmatprep.subr.mxu0 0.0
        %565 = vmatpush1.msra.mxu0 0.0
        %566 = vmatprep.subr.mxu0 0.0
        %567 = vmatpush1.msra.mxu0 0.0
        %568 = vmatprep.subr.mxu0 0.0
        %569 = vmatpush1.msra.mxu0 0.0
        %570 = vmatprep.subr.mxu0 0.0
        %571 = vmatpush1.msra.mxu0 0.0
        %572 = vmatprep.subr.mxu0 0.0
        %573 = vmatpush1.msra.mxu0 0.0
        %574 = vmatprep.subr.mxu0 0.0
        %575 = vmatpush1.msra.mxu0 0.0
        %576 = vmatprep.subr.mxu0 0.0
        %577 = vmatpush1.msra.mxu0 0.0
        %578 = vmatprep.subr.mxu0 0.0
        %579 = vmatpush1.msra.mxu0 0.0
        %580 = vmatprep.subr.mxu0 0.0
        %581 = vmatpush1.msra.mxu0 0.0
        %582 = vmatprep.mubr.f32.mxu0 0.0
        %583 = vmatmul.mubr.f32.gmra.mrb[0].mxu0 %v506
        %v584 = vpop.f32.mrb[0].mxu0
        %v585 = vadd.f32 0.0, %v584
        %v586 = vpop.f32.mrb[0].mxu0
        %v587 = vadd.f32 0.0, %v586
        %588 = vmatprep.mubr.f32.mxu0 0.0
        %589 = vmatmul.mubr.f32.gmra.mrb[0].mxu0 %v509
        %v590 = vpop.f32.mrb[0].mxu0
        %v591 = vadd.f32 0.0, %v590
        %v592 = vpop.f32.mrb[0].mxu0
        %v593 = vadd.f32 0.0, %v592
        %594 = vmatprep.mubr.f32.mxu0 0.0
        %595 = vmatmul.mubr.f32.gmra.mrb[0].mxu0 %v512
        %v596 = vpop.f32.mrb[0].mxu0
        %v597 = vadd.f32 0.0, %v596
        %v598 = vpop.f32.mrb[0].mxu0
        %v599 = vadd.f32 0.0, %v598
        %600 = vdwg.mxu0
        %601 = vrot.lane.b32.xlu0 %v585, 17
        %v602 = vpop.permute.xlu0 %601
        %603 = vrot.lane.b32.xlu0 %v591, 17
        %v604 = vpop.permute.xlu0 %603
        %605 = vrot.lane.b32.xlu0 %v597, 17
        %v606 = vpop.permute.xlu0 %605
        %607 = vrot.lane.b32.xlu0 %v587, 17
        %v608 = vpop.permute.xlu0 %607
        %609 = vrot.lane.b32.xlu0 %v593, 17
        %v610 = vpop.permute.xlu0 %609
        %611 = vrot.lane.b32.xlu0 %v599, 17
        %v612 = vpop.permute.xlu0 %611
        %v613 = vlaneseq
        %v614 = vand.u32 %v613, 127
        %vm615 = vcmp.lt.s32.totalorder %v614, 17
        %v616 = vsel %vm615, %v602, %v608
        %v617 = vsel %vm615, %v604, %v610
        %v618 = vsel %vm615, %v606, %v612
        %v619 = vsel %vm615, %v608, %v602
        %v620 = vsel %vm615, %v610, %v604
        %v621 = vsel %vm615, %v612, %v606
        %v622 = vld [vmem:[%s5] sm:$0x3]
        %v624 = vlaneseq
        %v625 = vshrl.u32 %v624, 7
        %v626 = vsub.s32 0, %v625
        %v627 = vrot.slane %v622, %v626
        %v628 = vlaneseq
        %v629 = vshrl.u32 %v628, 7
        %v630 = vsub.s32 1, %v629
        %v631 = vrot.slane %v622, %v630
        %v634 = vmul.f32 %v619, %v627
        %v635 = vmul.f32 %v616, %v631
        %v636 = vmul.f32 %v620, %v627
        %v637 = vmul.f32 %v617, %v631
        %v638 = vmul.f32 %v621, %v627
        %v639 = vmul.f32 %v618, %v631
        %v640 = vld [vmem:[%s4] sm:$0xff]
        %v641 = vld [vmem:[%s4 + $0x8] sm:$0xff]
        %v642 = vld [vmem:[%s4 + $0x10] sm:$0xff]
        %644 = vset.pattern.permute.xlu0 0
        %645 = vperm.xlu0 %644, %v640
        %v646 = vpop.permute.xlu0 %645
        %649 = vset.pattern.permute.xlu0 0
        %650 = vperm.xlu0 %649, %v641
        %v651 = vpop.permute.xlu0 %650
        %654 = vset.pattern.permute.xlu0 0
        %655 = vperm.xlu0 %654, %v642
        %v656 = vpop.permute.xlu0 %655
        %v658 = vmul.f32 %v634, %v646
        %v659 = vmul.f32 %v635, %v646
        %v660 = vmul.f32 %v636, %v651
        %v661 = vmul.f32 %v637, %v651
        %v662 = vmul.f32 %v638, %v656
        %v663 = vmul.f32 %v639, %v656
        %664 = vrot.lane.b32.xlu0 %v585, 16
        %v665 = vpop.permute.xlu0 %664
        %666 = vrot.lane.b32.xlu0 %v591, 16
        %v667 = vpop.permute.xlu0 %666
        %668 = vrot.lane.b32.xlu0 %v597, 16
        %v669 = vpop.permute.xlu0 %668
        %670 = vrot.lane.b32.xlu0 %v587, 16
        %v671 = vpop.permute.xlu0 %670
        %672 = vrot.lane.b32.xlu0 %v593, 16
        %v673 = vpop.permute.xlu0 %672
        %674 = vrot.lane.b32.xlu0 %v599, 16
        %v675 = vpop.permute.xlu0 %674
        %vm676 = vcmp.lt.s32.totalorder %v614, 16
        %v677 = vsel %vm676, %v665, %v671
        %v678 = vsel %vm676, %v667, %v673
        %v679 = vsel %vm676, %v669, %v675
        %v680 = vsel %vm676, %v671, %v665
        %v681 = vsel %vm676, %v673, %v667
        %v682 = vsel %vm676, %v675, %v669
        %s683 = scalar_lea.vmem %s5, 2
        %v684 = vld [vmem:[%s683] sm:$0x3]
        %v686 = vlaneseq
        %v687 = vshrl.u32 %v686, 7
        %v688 = vsub.s32 0, %v687
        %v689 = vrot.slane %v684, %v688
        %v690 = vlaneseq
        %v691 = vshrl.u32 %v690, 7
        %v692 = vsub.s32 1, %v691
        %v693 = vrot.slane %v684, %v692
        %v696 = vmul.f32 %v680, %v689
        %v697 = vmul.f32 %v677, %v693
        %v698 = vmul.f32 %v681, %v689
        %v699 = vmul.f32 %v678, %v693
        %v700 = vmul.f32 %v682, %v689
        %v701 = vmul.f32 %v679, %v693
        %s702 = scalar_lea.vmem %s4, 24
        %v703 = vld [vmem:[%s702] sm:$0xff]
        %v704 = vld [vmem:[%s702 + $0x8] sm:$0xff]
        %v705 = vld [vmem:[%s702 + $0x10] sm:$0xff]
        %707 = vset.pattern.permute.xlu0 0
        %708 = vperm.xlu0 %707, %v703
        %v709 = vpop.permute.xlu0 %708
        %712 = vset.pattern.permute.xlu0 0
        %713 = vperm.xlu0 %712, %v704
        %v714 = vpop.permute.xlu0 %713
        %717 = vset.pattern.permute.xlu0 0
        %718 = vperm.xlu0 %717, %v705
        %v719 = vpop.permute.xlu0 %718
        %v721 = vmul.f32 %v696, %v709
        %v722 = vmul.f32 %v697, %v709
        %v723 = vmul.f32 %v698, %v714
        %v724 = vmul.f32 %v699, %v714
        %v725 = vmul.f32 %v700, %v719
        %v726 = vmul.f32 %v701, %v719
        %v727 = vadd.f32 %v658, %v721
        %v728 = vadd.f32 %v659, %v722
        %v729 = vadd.f32 %v660, %v723
        %v730 = vadd.f32 %v661, %v724
        %v731 = vadd.f32 %v662, %v725
        %v732 = vadd.f32 %v663, %v726
        %733 = vrot.lane.b32.xlu0 %v585, 15
        %v734 = vpop.permute.xlu0 %733
        %735 = vrot.lane.b32.xlu0 %v591, 15
        %v736 = vpop.permute.xlu0 %735
        %737 = vrot.lane.b32.xlu0 %v597, 15
        %v738 = vpop.permute.xlu0 %737
        %739 = vrot.lane.b32.xlu0 %v587, 15
        %v740 = vpop.permute.xlu0 %739
        %741 = vrot.lane.b32.xlu0 %v593, 15
        %v742 = vpop.permute.xlu0 %741
        %743 = vrot.lane.b32.xlu0 %v599, 15
        %v744 = vpop.permute.xlu0 %743
        %vm745 = vcmp.lt.s32.totalorder %v614, 15
        %v746 = vsel %vm745, %v734, %v740
        %v747 = vsel %vm745, %v736, %v742
        %v748 = vsel %vm745, %v738, %v744
        %v749 = vsel %vm745, %v740, %v734
        %v750 = vsel %vm745, %v742, %v736
        %v751 = vsel %vm745, %v744, %v738
        %s752 = scalar_lea.vmem %s5, 4
        %v753 = vld [vmem:[%s752] sm:$0x3]
        %v755 = vlaneseq
        %v756 = vshrl.u32 %v755, 7
        %v757 = vsub.s32 0, %v756
        %v758 = vrot.slane %v753, %v757
        %v759 = vlaneseq
        %v760 = vshrl.u32 %v759, 7
        %v761 = vsub.s32 1, %v760
        %v762 = vrot.slane %v753, %v761
        %v765 = vmul.f32 %v749, %v758
        %v766 = vmul.f32 %v746, %v762
        %v767 = vmul.f32 %v750, %v758
        %v768 = vmul.f32 %v747, %v762
        %v769 = vmul.f32 %v751, %v758
        %v770 = vmul.f32 %v748, %v762
        %s771 = scalar_lea.vmem %s4, 48
        %v772 = vld [vmem:[%s771] sm:$0xff]
        %v773 = vld [vmem:[%s771 + $0x8] sm:$0xff]
        %v774 = vld [vmem:[%s771 + $0x10] sm:$0xff]
        %776 = vset.pattern.permute.xlu0 0
        %777 = vperm.xlu0 %776, %v772
        %v778 = vpop.permute.xlu0 %777
        %781 = vset.pattern.permute.xlu0 0
        %782 = vperm.xlu0 %781, %v773
        %v783 = vpop.permute.xlu0 %782
        %786 = vset.pattern.permute.xlu0 0
        %787 = vperm.xlu0 %786, %v774
        %v788 = vpop.permute.xlu0 %787
        %v790 = vmul.f32 %v765, %v778
        %v791 = vmul.f32 %v766, %v778
        %v792 = vmul.f32 %v767, %v783
        %v793 = vmul.f32 %v768, %v783
        %v794 = vmul.f32 %v769, %v788
        %v795 = vmul.f32 %v770, %v788
        %v796 = vadd.f32 %v727, %v790
        %v797 = vadd.f32 %v728, %v791
        %v798 = vadd.f32 %v729, %v792
        %v799 = vadd.f32 %v730, %v793
        %v800 = vadd.f32 %v731, %v794
        %v801 = vadd.f32 %v732, %v795
        %802 = vrot.lane.b32.xlu0 %v585, 1
        %v803 = vpop.permute.xlu0 %802
        %804 = vrot.lane.b32.xlu0 %v591, 1
        %v805 = vpop.permute.xlu0 %804
        %806 = vrot.lane.b32.xlu0 %v597, 1
        %v807 = vpop.permute.xlu0 %806
        %808 = vrot.lane.b32.xlu0 %v587, 1
        %v809 = vpop.permute.xlu0 %808
        %810 = vrot.lane.b32.xlu0 %v593, 1
        %v811 = vpop.permute.xlu0 %810
        %812 = vrot.lane.b32.xlu0 %v599, 1
        %v813 = vpop.permute.xlu0 %812
        %vm814 = vcmp.lt.s32.totalorder %v614, 1
        %v815 = vsel %vm814, %v803, %v809
        %v816 = vsel %vm814, %v805, %v811
        %v817 = vsel %vm814, %v807, %v813
        %v818 = vsel %vm814, %v809, %v803
        %v819 = vsel %vm814, %v811, %v805
        %v820 = vsel %vm814, %v813, %v807
        %s821 = scalar_lea.vmem %s5, 6
        %v822 = vld [vmem:[%s821] sm:$0x3]
        %v824 = vlaneseq
        %v825 = vshrl.u32 %v824, 7
        %v826 = vsub.s32 0, %v825
        %v827 = vrot.slane %v822, %v826
        %v828 = vlaneseq
        %v829 = vshrl.u32 %v828, 7
        %v830 = vsub.s32 1, %v829
        %v831 = vrot.slane %v822, %v830
        %v834 = vmul.f32 %v818, %v827
        %v835 = vmul.f32 %v815, %v831
        %v836 = vmul.f32 %v819, %v827
        %v837 = vmul.f32 %v816, %v831
        %v838 = vmul.f32 %v820, %v827
        %v839 = vmul.f32 %v817, %v831
        %s840 = scalar_lea.vmem %s4, 72
        %v841 = vld [vmem:[%s840] sm:$0xff]
        %v842 = vld [vmem:[%s840 + $0x8] sm:$0xff]
        %v843 = vld [vmem:[%s840 + $0x10] sm:$0xff]
        %845 = vset.pattern.permute.xlu0 0
        %846 = vperm.xlu0 %845, %v841
        %v847 = vpop.permute.xlu0 %846
        %850 = vset.pattern.permute.xlu0 0
        %851 = vperm.xlu0 %850, %v842
        %v852 = vpop.permute.xlu0 %851
        %855 = vset.pattern.permute.xlu0 0
        %856 = vperm.xlu0 %855, %v843
        %v857 = vpop.permute.xlu0 %856
        %v859 = vmul.f32 %v834, %v847
        %v860 = vmul.f32 %v835, %v847
        %v861 = vmul.f32 %v836, %v852
        %v862 = vmul.f32 %v837, %v852
        %v863 = vmul.f32 %v838, %v857
        %v864 = vmul.f32 %v839, %v857
        %v865 = vadd.f32 %v796, %v859
        %v866 = vadd.f32 %v797, %v860
        %v867 = vadd.f32 %v798, %v861
        %v868 = vadd.f32 %v799, %v862
        %v869 = vadd.f32 %v800, %v863
        %v870 = vadd.f32 %v801, %v864
        %s871 = scalar_lea.vmem %s5, 8
        %v872 = vld [vmem:[%s871] sm:$0x3]
        %v874 = vlaneseq
        %v875 = vshrl.u32 %v874, 7
        %v876 = vsub.s32 0, %v875
        %v877 = vrot.slane %v872, %v876
        %v878 = vlaneseq
        %v879 = vshrl.u32 %v878, 7
        %v880 = vsub.s32 1, %v879
        %v881 = vrot.slane %v872, %v880
        %v884 = vmul.f32 %v585, %v877
        %v885 = vmul.f32 %v587, %v881
        %v886 = vmul.f32 %v591, %v877
        %v887 = vmul.f32 %v593, %v881
        %v888 = vmul.f32 %v597, %v877
        %v889 = vmul.f32 %v599, %v881
        %s890 = scalar_lea.vmem %s4, 96
        %v891 = vld [vmem:[%s890] sm:$0xff]
        %v892 = vld [vmem:[%s890 + $0x8] sm:$0xff]
        %v893 = vld [vmem:[%s890 + $0x10] sm:$0xff]
        %895 = vset.pattern.permute.xlu0 0
        %896 = vperm.xlu0 %895, %v891
        %v897 = vpop.permute.xlu0 %896
        %900 = vset.pattern.permute.xlu0 0
        %901 = vperm.xlu0 %900, %v892
        %v902 = vpop.permute.xlu0 %901
        %905 = vset.pattern.permute.xlu0 0
        %906 = vperm.xlu0 %905, %v893
        %v907 = vpop.permute.xlu0 %906
        %v909 = vmul.f32 %v884, %v897
        %v910 = vmul.f32 %v885, %v897
        %v911 = vmul.f32 %v886, %v902
        %v912 = vmul.f32 %v887, %v902
        %v913 = vmul.f32 %v888, %v907
        %v914 = vmul.f32 %v889, %v907
        %v915 = vadd.f32 %v865, %v909
        %v916 = vadd.f32 %v866, %v910
        %v917 = vadd.f32 %v867, %v911
        %v918 = vadd.f32 %v868, %v912
        %v919 = vadd.f32 %v869, %v913
        %v920 = vadd.f32 %v870, %v914
        %921 = vrot.lane.b32.xlu0 %v585, 127
        %v922 = vpop.permute.xlu0 %921
        %923 = vrot.lane.b32.xlu0 %v591, 127
        %v924 = vpop.permute.xlu0 %923
        %925 = vrot.lane.b32.xlu0 %v597, 127
        %v926 = vpop.permute.xlu0 %925
        %927 = vrot.lane.b32.xlu0 %v587, 127
        %v928 = vpop.permute.xlu0 %927
        %929 = vrot.lane.b32.xlu0 %v593, 127
        %v930 = vpop.permute.xlu0 %929
        %931 = vrot.lane.b32.xlu0 %v599, 127
        %v932 = vpop.permute.xlu0 %931
        %vm933 = vcmp.lt.s32.totalorder %v614, 127
        %v934 = vsel %vm933, %v922, %v928
        %v935 = vsel %vm933, %v924, %v930
        %v936 = vsel %vm933, %v926, %v932
        %v937 = vsel %vm933, %v928, %v922
        %v938 = vsel %vm933, %v930, %v924
        %v939 = vsel %vm933, %v932, %v926
        %s940 = scalar_lea.vmem %s5, 10
        %v941 = vld [vmem:[%s940] sm:$0x3]
        %v943 = vlaneseq
        %v944 = vshrl.u32 %v943, 7
        %v945 = vsub.s32 0, %v944
        %v946 = vrot.slane %v941, %v945
        %v947 = vlaneseq
        %v948 = vshrl.u32 %v947, 7
        %v949 = vsub.s32 1, %v948
        %v950 = vrot.slane %v941, %v949
        %v953 = vmul.f32 %v934, %v946
        %v954 = vmul.f32 %v937, %v950
        %v955 = vmul.f32 %v935, %v946
        %v956 = vmul.f32 %v938, %v950
        %v957 = vmul.f32 %v936, %v946
        %v958 = vmul.f32 %v939, %v950
        %s959 = scalar_lea.vmem %s4, 120
        %v960 = vld [vmem:[%s959] sm:$0xff]
        %v961 = vld [vmem:[%s959 + $0x8] sm:$0xff]
        %v962 = vld [vmem:[%s959 + $0x10] sm:$0xff]
        %964 = vset.pattern.permute.xlu0 0
        %965 = vperm.xlu0 %964, %v960
        %v966 = vpop.permute.xlu0 %965
        %969 = vset.pattern.permute.xlu0 0
        %970 = vperm.xlu0 %969, %v961
        %v971 = vpop.permute.xlu0 %970
        %974 = vset.pattern.permute.xlu0 0
        %975 = vperm.xlu0 %974, %v962
        %v976 = vpop.permute.xlu0 %975
        %v978 = vmul.f32 %v953, %v966
        %v979 = vmul.f32 %v954, %v966
        %v980 = vmul.f32 %v955, %v971
        %v981 = vmul.f32 %v956, %v971
        %v982 = vmul.f32 %v957, %v976
        %v983 = vmul.f32 %v958, %v976
        %v984 = vadd.f32 %v915, %v978
        %v985 = vadd.f32 %v916, %v979
        %v986 = vadd.f32 %v917, %v980
        %v987 = vadd.f32 %v918, %v981
        %v988 = vadd.f32 %v919, %v982
        %v989 = vadd.f32 %v920, %v983
        %990 = vrot.lane.b32.xlu0 %v585, 113
        %v991 = vpop.permute.xlu0 %990
        %992 = vrot.lane.b32.xlu0 %v591, 113
        %v993 = vpop.permute.xlu0 %992
        %994 = vrot.lane.b32.xlu0 %v597, 113
        %v995 = vpop.permute.xlu0 %994
        %996 = vrot.lane.b32.xlu0 %v587, 113
        %v997 = vpop.permute.xlu0 %996
        %998 = vrot.lane.b32.xlu0 %v593, 113
        %v999 = vpop.permute.xlu0 %998
        %1000 = vrot.lane.b32.xlu0 %v599, 113
        %v1001 = vpop.permute.xlu0 %1000
        %vm1002 = vcmp.lt.s32.totalorder %v614, 113
        %v1003 = vsel %vm1002, %v991, %v997
        %v1004 = vsel %vm1002, %v993, %v999
        %v1005 = vsel %vm1002, %v995, %v1001
        %v1006 = vsel %vm1002, %v997, %v991
        %v1007 = vsel %vm1002, %v999, %v993
        %v1008 = vsel %vm1002, %v1001, %v995
        %s1009 = scalar_lea.vmem %s5, 12
        %v1010 = vld [vmem:[%s1009] sm:$0x3]
        %v1012 = vlaneseq
        %v1013 = vshrl.u32 %v1012, 7
        %v1014 = vsub.s32 0, %v1013
        %v1015 = vrot.slane %v1010, %v1014
        %v1016 = vlaneseq
        %v1017 = vshrl.u32 %v1016, 7
        %v1018 = vsub.s32 1, %v1017
        %v1019 = vrot.slane %v1010, %v1018
        %v1022 = vmul.f32 %v1003, %v1015
        %v1023 = vmul.f32 %v1006, %v1019
        %v1024 = vmul.f32 %v1004, %v1015
        %v1025 = vmul.f32 %v1007, %v1019
        %v1026 = vmul.f32 %v1005, %v1015
        %v1027 = vmul.f32 %v1008, %v1019
        %s1028 = scalar_lea.vmem %s4, 144
        %v1029 = vld [vmem:[%s1028] sm:$0xff]
        %v1030 = vld [vmem:[%s1028 + $0x8] sm:$0xff]
        %v1031 = vld [vmem:[%s1028 + $0x10] sm:$0xff]
        %1033 = vset.pattern.permute.xlu0 0
        %1034 = vperm.xlu0 %1033, %v1029
        %v1035 = vpop.permute.xlu0 %1034
        %1038 = vset.pattern.permute.xlu0 0
        %1039 = vperm.xlu0 %1038, %v1030
        %v1040 = vpop.permute.xlu0 %1039
        %1043 = vset.pattern.permute.xlu0 0
        %1044 = vperm.xlu0 %1043, %v1031
        %v1045 = vpop.permute.xlu0 %1044
        %v1047 = vmul.f32 %v1022, %v1035
        %v1048 = vmul.f32 %v1023, %v1035
        %v1049 = vmul.f32 %v1024, %v1040
        %v1050 = vmul.f32 %v1025, %v1040
        %v1051 = vmul.f32 %v1026, %v1045
        %v1052 = vmul.f32 %v1027, %v1045
        %v1053 = vadd.f32 %v984, %v1047
        %v1054 = vadd.f32 %v985, %v1048
        %v1055 = vadd.f32 %v986, %v1049
        %v1056 = vadd.f32 %v987, %v1050
        %v1057 = vadd.f32 %v988, %v1051
        %v1058 = vadd.f32 %v989, %v1052
        %1059 = vrot.lane.b32.xlu0 %v585, 112
        %v1060 = vpop.permute.xlu0 %1059
        %1061 = vrot.lane.b32.xlu0 %v591, 112
        %v1062 = vpop.permute.xlu0 %1061
        %1063 = vrot.lane.b32.xlu0 %v597, 112
        %v1064 = vpop.permute.xlu0 %1063
        %1065 = vrot.lane.b32.xlu0 %v587, 112
        %v1066 = vpop.permute.xlu0 %1065
        %1067 = vrot.lane.b32.xlu0 %v593, 112
        %v1068 = vpop.permute.xlu0 %1067
        %1069 = vrot.lane.b32.xlu0 %v599, 112
        %v1070 = vpop.permute.xlu0 %1069
        %vm1071 = vcmp.lt.s32.totalorder %v614, 112
        %v1072 = vsel %vm1071, %v1060, %v1066
        %v1073 = vsel %vm1071, %v1062, %v1068
        %v1074 = vsel %vm1071, %v1064, %v1070
        %v1075 = vsel %vm1071, %v1066, %v1060
        %v1076 = vsel %vm1071, %v1068, %v1062
        %v1077 = vsel %vm1071, %v1070, %v1064
        %s1078 = scalar_lea.vmem %s5, 14
        %v1079 = vld [vmem:[%s1078] sm:$0x3]
        %v1081 = vlaneseq
        %v1082 = vshrl.u32 %v1081, 7
        %v1083 = vsub.s32 0, %v1082
        %v1084 = vrot.slane %v1079, %v1083
        %v1085 = vlaneseq
        %v1086 = vshrl.u32 %v1085, 7
        %v1087 = vsub.s32 1, %v1086
        %v1088 = vrot.slane %v1079, %v1087
        %v1091 = vmul.f32 %v1072, %v1084
        %v1092 = vmul.f32 %v1075, %v1088
        %v1093 = vmul.f32 %v1073, %v1084
        %v1094 = vmul.f32 %v1076, %v1088
        %v1095 = vmul.f32 %v1074, %v1084
        %v1096 = vmul.f32 %v1077, %v1088
        %s1097 = scalar_lea.vmem %s4, 168
        %v1098 = vld [vmem:[%s1097] sm:$0xff]
        %v1099 = vld [vmem:[%s1097 + $0x8] sm:$0xff]
        %v1100 = vld [vmem:[%s1097 + $0x10] sm:$0xff]
        %1102 = vset.pattern.permute.xlu0 0
        %1103 = vperm.xlu0 %1102, %v1098
        %v1104 = vpop.permute.xlu0 %1103
        %1107 = vset.pattern.permute.xlu0 0
        %1108 = vperm.xlu0 %1107, %v1099
        %v1109 = vpop.permute.xlu0 %1108
        %1112 = vset.pattern.permute.xlu0 0
        %1113 = vperm.xlu0 %1112, %v1100
        %v1114 = vpop.permute.xlu0 %1113
        %v1116 = vmul.f32 %v1091, %v1104
        %v1117 = vmul.f32 %v1092, %v1104
        %v1118 = vmul.f32 %v1093, %v1109
        %v1119 = vmul.f32 %v1094, %v1109
        %v1120 = vmul.f32 %v1095, %v1114
        %v1121 = vmul.f32 %v1096, %v1114
        %v1122 = vadd.f32 %v1053, %v1116
        %v1123 = vadd.f32 %v1054, %v1117
        %v1124 = vadd.f32 %v1055, %v1118
        %v1125 = vadd.f32 %v1056, %v1119
        %v1126 = vadd.f32 %v1057, %v1120
        %v1127 = vadd.f32 %v1058, %v1121
        %1128 = vrot.lane.b32.xlu0 %v585, 111
        %v1129 = vpop.permute.xlu0 %1128
        %1130 = vrot.lane.b32.xlu0 %v591, 111
        %v1131 = vpop.permute.xlu0 %1130
        %1132 = vrot.lane.b32.xlu0 %v597, 111
        %v1133 = vpop.permute.xlu0 %1132
        %1134 = vrot.lane.b32.xlu0 %v587, 111
        %v1135 = vpop.permute.xlu0 %1134
        %1136 = vrot.lane.b32.xlu0 %v593, 111
        %v1137 = vpop.permute.xlu0 %1136
        %1138 = vrot.lane.b32.xlu0 %v599, 111
        %v1139 = vpop.permute.xlu0 %1138
        %vm1140 = vcmp.lt.s32.totalorder %v614, 111
        %v1141 = vsel %vm1140, %v1129, %v1135
        %v1142 = vsel %vm1140, %v1131, %v1137
        %v1143 = vsel %vm1140, %v1133, %v1139
        %v1144 = vsel %vm1140, %v1135, %v1129
        %v1145 = vsel %vm1140, %v1137, %v1131
        %v1146 = vsel %vm1140, %v1139, %v1133
        %s1147 = scalar_lea.vmem %s5, 16
        %v1148 = vld [vmem:[%s1147] sm:$0x3]
        %v1150 = vlaneseq
        %v1151 = vshrl.u32 %v1150, 7
        %v1152 = vsub.s32 0, %v1151
        %v1153 = vrot.slane %v1148, %v1152
        %v1154 = vlaneseq
        %v1155 = vshrl.u32 %v1154, 7
        %v1156 = vsub.s32 1, %v1155
        %v1157 = vrot.slane %v1148, %v1156
        %v1160 = vmul.f32 %v1141, %v1153
        %v1161 = vmul.f32 %v1144, %v1157
        %v1162 = vmul.f32 %v1142, %v1153
        %v1163 = vmul.f32 %v1145, %v1157
        %v1164 = vmul.f32 %v1143, %v1153
        %v1165 = vmul.f32 %v1146, %v1157
        %s1166 = scalar_lea.vmem %s4, 192
        %v1167 = vld [vmem:[%s1166] sm:$0xff]
        %v1168 = vld [vmem:[%s1166 + $0x8] sm:$0xff]
        %v1169 = vld [vmem:[%s1166 + $0x10] sm:$0xff]
        %1171 = vset.pattern.permute.xlu0 0
        %1172 = vperm.xlu0 %1171, %v1167
        %v1173 = vpop.permute.xlu0 %1172
        %1176 = vset.pattern.permute.xlu0 0
        %1177 = vperm.xlu0 %1176, %v1168
        %v1178 = vpop.permute.xlu0 %1177
        %1181 = vset.pattern.permute.xlu0 0
        %1182 = vperm.xlu0 %1181, %v1169
        %v1183 = vpop.permute.xlu0 %1182
        %v1185 = vmul.f32 %v1160, %v1173
        %v1186 = vmul.f32 %v1161, %v1173
        %v1187 = vmul.f32 %v1162, %v1178
        %v1188 = vmul.f32 %v1163, %v1178
        %v1189 = vmul.f32 %v1164, %v1183
        %v1190 = vmul.f32 %v1165, %v1183
        %v1191 = vadd.f32 %v1122, %v1185
        %v1192 = vadd.f32 %v1123, %v1186
        %v1193 = vadd.f32 %v1124, %v1187
        %v1194 = vadd.f32 %v1125, %v1188
        %v1195 = vadd.f32 %v1126, %v1189
        %v1196 = vadd.f32 %v1127, %v1190
        %v1197 = vld [vmem:[#allocation2] sm:$0xff]
        %v1198 = vld [vmem:[#allocation2 + $0x8] sm:$0xff]
        %v1199 = vld [vmem:[#allocation2 + $0x10] sm:$0xff]
        %v1200 = vld [vmem:[#allocation2 + $0x18] sm:$0xff]
        %v1201 = vld [vmem:[#allocation2 + $0x20] sm:$0xff]
        %v1202 = vld [vmem:[#allocation2 + $0x28] sm:$0xff]
        %v1203 = vld [vmem:[#allocation2 + $0x30] sm:$0xff]
        %v1204 = vld [vmem:[#allocation2 + $0x38] sm:$0xff]
        %v1205 = vld [vmem:[#allocation2 + $0x40] sm:$0xff]
        %v1206 = vld [vmem:[#allocation2 + $0x48] sm:$0xff]
        %v1207 = vld [vmem:[#allocation2 + $0x50] sm:$0xff]
        %v1208 = vld [vmem:[#allocation2 + $0x58] sm:$0xff]
        %v1209 = vld [vmem:[#allocation2 + $0x60] sm:$0xff]
        %v1210 = vld [vmem:[#allocation2 + $0x68] sm:$0xff]
        %v1211 = vld [vmem:[#allocation2 + $0x70] sm:$0xff]
        %v1212 = vld [vmem:[#allocation2 + $0x78] sm:$0xff]
        %v1213 = vld [vmem:[#allocation2 + $0x80] sm:$0xff]
        %v1214 = vld [vmem:[#allocation2 + $0x88] sm:$0xff]
        %v1215 = vld [vmem:[#allocation2 + $0x90] sm:$0xff]
        %v1216 = vld [vmem:[#allocation2 + $0x98] sm:$0xff]
        %v1217 = vld [vmem:[#allocation2 + $0xa0] sm:$0xff]
        %v1218 = vld [vmem:[#allocation2 + $0xa8] sm:$0xff]
        %v1219 = vld [vmem:[#allocation2 + $0xb0] sm:$0xff]
        %v1220 = vld [vmem:[#allocation2 + $0xb8] sm:$0xff]
        %v1221 = vld [vmem:[#allocation2 + $0xc0] sm:$0xff]
        %v1222 = vld [vmem:[#allocation2 + $0xc8] sm:$0xff]
        %v1223 = vld [vmem:[#allocation2 + $0xd0] sm:$0xff]
        %v1224 = vld [vmem:[#allocation2 + $0xd8] sm:$0xff]
        %v1225 = vld [vmem:[#allocation2 + $0xe0] sm:$0xff]
        %v1226 = vld [vmem:[#allocation2 + $0xe8] sm:$0xff]
        %v1227 = vld [vmem:[#allocation2 + $0xf0] sm:$0xff]
        %v1228 = vld [vmem:[#allocation2 + $0xf8] sm:$0xff]
        %v1229 = vld [vmem:[#allocation2 + $0x100] sm:$0xff]
        %v1230 = vld [vmem:[#allocation2 + $0x108] sm:$0xff]
        %v1231 = vld [vmem:[#allocation2 + $0x110] sm:$0xff]
        %v1232 = vld [vmem:[#allocation2 + $0x118] sm:$0xff]
        %v1233 = vld [vmem:[#allocation2 + $0x120] sm:$0xff]
        %v1234 = vld [vmem:[#allocation2 + $0x128] sm:$0xff]
        %v1235 = vld [vmem:[#allocation2 + $0x130] sm:$0xff]
        %v1236 = vld [vmem:[#allocation2 + $0x138] sm:$0xff]
        %v1237 = vld [vmem:[#allocation2 + $0x140] sm:$0xff]
        %v1238 = vld [vmem:[#allocation2 + $0x148] sm:$0xff]
        %v1239 = vld [vmem:[#allocation2 + $0x150] sm:$0xff]
        %v1240 = vld [vmem:[#allocation2 + $0x158] sm:$0xff]
        %v1241 = vld [vmem:[#allocation2 + $0x160] sm:$0xff]
        %v1242 = vld [vmem:[#allocation2 + $0x168] sm:$0xff]
        %v1243 = vld [vmem:[#allocation2 + $0x170] sm:$0xff]
        %v1244 = vld [vmem:[#allocation2 + $0x178] sm:$0xff]
        %v1245 = vld [vmem:[#allocation2 + $0x180] sm:$0xff]
        %v1246 = vld [vmem:[#allocation2 + $0x188] sm:$0xff]
        %v1247 = vld [vmem:[#allocation2 + $0x190] sm:$0xff]
        %v1248 = vld [vmem:[#allocation2 + $0x198] sm:$0xff]
        %v1249 = vld [vmem:[#allocation2 + $0x1a0] sm:$0xff]
        %v1250 = vld [vmem:[#allocation2 + $0x1a8] sm:$0xff]
        %v1251 = vld [vmem:[#allocation2 + $0x1b0] sm:$0xff]
        %v1252 = vld [vmem:[#allocation2 + $0x1b8] sm:$0xff]
        %v1253 = vld [vmem:[#allocation2 + $0x1c0] sm:$0xff]
        %v1254 = vld [vmem:[#allocation2 + $0x1c8] sm:$0xff]
        %v1255 = vld [vmem:[#allocation2 + $0x1d0] sm:$0xff]
        %v1256 = vld [vmem:[#allocation2 + $0x1d8] sm:$0xff]
        %v1257 = vld [vmem:[#allocation2 + $0x1e0] sm:$0xff]
        %v1258 = vld [vmem:[#allocation2 + $0x1e8] sm:$0xff]
        %v1259 = vld [vmem:[#allocation2 + $0x1f0] sm:$0xff]
        %v1260 = vld [vmem:[#allocation2 + $0x1f8] sm:$0xff]
        %v1261 = vld [vmem:[#allocation2 + $0x200] sm:$0xff]
        %v1262 = vld [vmem:[#allocation2 + $0x208] sm:$0xff]
        %v1263 = vld [vmem:[#allocation2 + $0x210] sm:$0xff]
        %v1264 = vld [vmem:[#allocation2 + $0x218] sm:$0xff]
        %v1265 = vld [vmem:[#allocation2 + $0x220] sm:$0xff]
        %v1266 = vld [vmem:[#allocation2 + $0x228] sm:$0xff]
        %v1267 = vld [vmem:[#allocation2 + $0x230] sm:$0xff]
        %v1268 = vld [vmem:[#allocation2 + $0x238] sm:$0xff]
        %v1269 = vld [vmem:[#allocation2 + $0x240] sm:$0xff]
        %v1270 = vld [vmem:[#allocation2 + $0x248] sm:$0xff]
        %v1271 = vld [vmem:[#allocation2 + $0x250] sm:$0xff]
        %v1272 = vld [vmem:[#allocation2 + $0x258] sm:$0xff]
        %v1273 = vld [vmem:[#allocation2 + $0x260] sm:$0xff]
        %v1274 = vld [vmem:[#allocation2 + $0x268] sm:$0xff]
        %v1275 = vld [vmem:[#allocation2 + $0x270] sm:$0xff]
        %v1276 = vld [vmem:[#allocation2 + $0x278] sm:$0xff]
        %v1277 = vld [vmem:[#allocation2 + $0x280] sm:$0xff]
        %v1278 = vld [vmem:[#allocation2 + $0x288] sm:$0xff]
        %v1279 = vld [vmem:[#allocation2 + $0x290] sm:$0xff]
        %v1280 = vld [vmem:[#allocation2 + $0x298] sm:$0xff]
        %v1281 = vld [vmem:[#allocation2 + $0x2a0] sm:$0xff]
        %v1282 = vld [vmem:[#allocation2 + $0x2a8] sm:$0xff]
        %v1283 = vld [vmem:[#allocation2 + $0x2b0] sm:$0xff]
        %v1284 = vld [vmem:[#allocation2 + $0x2b8] sm:$0xff]
        %v1285 = vld [vmem:[#allocation2 + $0x2c0] sm:$0xff]
        %v1286 = vld [vmem:[#allocation2 + $0x2c8] sm:$0xff]
        %v1287 = vld [vmem:[#allocation2 + $0x2d0] sm:$0xff]
        %v1288 = vld [vmem:[#allocation2 + $0x2d8] sm:$0xff]
        %v1289 = vld [vmem:[#allocation2 + $0x2e0] sm:$0xff]
        %v1290 = vld [vmem:[#allocation2 + $0x2e8] sm:$0xff]
        %v1291 = vld [vmem:[#allocation2 + $0x2f0] sm:$0xff]
        %v1292 = vld [vmem:[#allocation2 + $0x2f8] sm:$0xff]
        %v1293 = vld [vmem:[#allocation2 + $0x300] sm:$0xff]
        %v1294 = vld [vmem:[#allocation2 + $0x308] sm:$0xff]
        %v1295 = vld [vmem:[#allocation2 + $0x310] sm:$0xff]
        %v1296 = vld [vmem:[#allocation2 + $0x318] sm:$0xff]
        %v1297 = vld [vmem:[#allocation2 + $0x320] sm:$0xff]
        %v1298 = vld [vmem:[#allocation2 + $0x328] sm:$0xff]
        %v1299 = vld [vmem:[#allocation2 + $0x330] sm:$0xff]
        %v1300 = vld [vmem:[#allocation2 + $0x338] sm:$0xff]
        %v1301 = vld [vmem:[#allocation2 + $0x340] sm:$0xff]
        %v1302 = vld [vmem:[#allocation2 + $0x348] sm:$0xff]
        %v1303 = vld [vmem:[#allocation2 + $0x350] sm:$0xff]
        %v1304 = vld [vmem:[#allocation2 + $0x358] sm:$0xff]
        %v1305 = vld [vmem:[#allocation2 + $0x360] sm:$0xff]
        %v1306 = vld [vmem:[#allocation2 + $0x368] sm:$0xff]
        %v1307 = vld [vmem:[#allocation2 + $0x370] sm:$0xff]
        %v1308 = vld [vmem:[#allocation2 + $0x378] sm:$0xff]
        %v1309 = vld [vmem:[#allocation2 + $0x380] sm:$0xff]
        %v1310 = vld [vmem:[#allocation2 + $0x388] sm:$0xff]
        %v1311 = vld [vmem:[#allocation2 + $0x390] sm:$0xff]
        %v1312 = vld [vmem:[#allocation2 + $0x398] sm:$0xff]
        %v1313 = vld [vmem:[#allocation2 + $0x3a0] sm:$0xff]
        %v1314 = vld [vmem:[#allocation2 + $0x3a8] sm:$0xff]
        %v1315 = vld [vmem:[#allocation2 + $0x3b0] sm:$0xff]
        %v1316 = vld [vmem:[#allocation2 + $0x3b8] sm:$0xff]
        %v1317 = vld [vmem:[#allocation2 + $0x3c0] sm:$0xff]
        %v1318 = vld [vmem:[#allocation2 + $0x3c8] sm:$0xff]
        %v1319 = vld [vmem:[#allocation2 + $0x3d0] sm:$0xff]
        %v1320 = vld [vmem:[#allocation2 + $0x3d8] sm:$0xff]
        %v1321 = vld [vmem:[#allocation2 + $0x3e0] sm:$0xff]
        %v1322 = vld [vmem:[#allocation2 + $0x3e8] sm:$0xff]
        %v1323 = vld [vmem:[#allocation2 + $0x3f0] sm:$0xff]
        %v1324 = vld [vmem:[#allocation2 + $0x3f8] sm:$0xff]
        %1325 = vmatprep.subr.mxu0 %v1198
        %1326 = vmatpush1.msra.mxu0 %v1197
        %1327 = vmatprep.subr.mxu0 %v1202
        %1328 = vmatpush1.msra.mxu0 %v1201
        %1329 = vmatprep.subr.mxu0 %v1206
        %1330 = vmatpush1.msra.mxu0 %v1205
        %1331 = vmatprep.subr.mxu0 %v1210
        %1332 = vmatpush1.msra.mxu0 %v1209
        %1333 = vmatprep.subr.mxu0 %v1214
        %1334 = vmatpush1.msra.mxu0 %v1213
        %1335 = vmatprep.subr.mxu0 %v1218
        %1336 = vmatpush1.msra.mxu0 %v1217
        %1337 = vmatprep.subr.mxu0 %v1222
        %1338 = vmatpush1.msra.mxu0 %v1221
        %1339 = vmatprep.subr.mxu0 %v1226
        %1340 = vmatpush1.msra.mxu0 %v1225
        %1341 = vmatprep.subr.mxu0 %v1230
        %1342 = vmatpush1.msra.mxu0 %v1229
        %1343 = vmatprep.subr.mxu0 %v1234
        %1344 = vmatpush1.msra.mxu0 %v1233
        %1345 = vmatprep.subr.mxu0 %v1238
        %1346 = vmatpush1.msra.mxu0 %v1237
        %1347 = vmatprep.subr.mxu0 %v1242
        %1348 = vmatpush1.msra.mxu0 %v1241
        %1349 = vmatprep.subr.mxu0 %v1246
        %1350 = vmatpush1.msra.mxu0 %v1245
        %1351 = vmatprep.subr.mxu0 %v1250
        %1352 = vmatpush1.msra.mxu0 %v1249
        %1353 = vmatprep.subr.mxu0 %v1254
        %1354 = vmatpush1.msra.mxu0 %v1253
        %1355 = vmatprep.subr.mxu0 %v1258
        %1356 = vmatpush1.msra.mxu0 %v1257
        %1357 = vmatprep.subr.mxu0 %v1262
        %1358 = vmatpush1.msra.mxu0 %v1261
        %1359 = vmatprep.subr.mxu0 %v1266
        %1360 = vmatpush1.msra.mxu0 %v1265
        %1361 = vmatprep.subr.mxu0 %v1270
        %1362 = vmatpush1.msra.mxu0 %v1269
        %1363 = vmatprep.subr.mxu0 %v1274
        %1364 = vmatpush1.msra.mxu0 %v1273
        %1365 = vmatprep.subr.mxu0 %v1278
        %1366 = vmatpush1.msra.mxu0 %v1277
        %1367 = vmatprep.subr.mxu0 %v1282
        %1368 = vmatpush1.msra.mxu0 %v1281
        %1369 = vmatprep.subr.mxu0 %v1286
        %1370 = vmatpush1.msra.mxu0 %v1285
        %1371 = vmatprep.subr.mxu0 %v1290
        %1372 = vmatpush1.msra.mxu0 %v1289
        %1373 = vmatprep.subr.mxu0 %v1294
        %1374 = vmatpush1.msra.mxu0 %v1293
        %1375 = vmatprep.subr.mxu0 %v1298
        %1376 = vmatpush1.msra.mxu0 %v1297
        %1377 = vmatprep.subr.mxu0 %v1302
        %1378 = vmatpush1.msra.mxu0 %v1301
        %1379 = vmatprep.subr.mxu0 %v1306
        %1380 = vmatpush1.msra.mxu0 %v1305
        %1381 = vmatprep.subr.mxu0 %v1310
        %1382 = vmatpush1.msra.mxu0 %v1309
        %1383 = vmatprep.subr.mxu0 %v1314
        %1384 = vmatpush1.msra.mxu0 %v1313
        %1385 = vmatprep.subr.mxu0 %v1318
        %1386 = vmatpush1.msra.mxu0 %v1317
        %1387 = vmatprep.subr.mxu0 %v1322
        %1388 = vmatpush1.msra.mxu0 %v1321
        %1389 = vmatprep.mubr.f32.mxu0 %v1192
        %1390 = vmatmul.mubr.f32.gmra.mrb[0].mxu0 %v1191
        %v1391 = vpop.f32.mrb[0].mxu0
        %v1392 = vadd.f32 0.0, %v1391
        %v1393 = vpop.f32.mrb[0].mxu0
        %v1394 = vadd.f32 0.0, %v1393
        %1395 = vmatprep.mubr.f32.mxu0 %v1194
        %1396 = vmatmul.mubr.f32.gmra.mrb[0].mxu0 %v1193
        %v1397 = vpop.f32.mrb[0].mxu0
        %v1398 = vadd.f32 0.0, %v1397
        %v1399 = vpop.f32.mrb[0].mxu0
        %v1400 = vadd.f32 0.0, %v1399
        %1401 = vdwg.mxu0
        %1402 = vmatprep.subr.mxu0 %v1200
        %1403 = vmatpush1.msra.mxu0 %v1199
        %1404 = vmatprep.subr.mxu0 %v1204
        %1405 = vmatpush1.msra.mxu0 %v1203
        %1406 = vmatprep.subr.mxu0 %v1208
        %1407 = vmatpush1.msra.mxu0 %v1207
        %1408 = vmatprep.subr.mxu0 %v1212
        %1409 = vmatpush1.msra.mxu0 %v1211
        %1410 = vmatprep.subr.mxu0 %v1216
        %1411 = vmatpush1.msra.mxu0 %v1215
        %1412 = vmatprep.subr.mxu0 %v1220
        %1413 = vmatpush1.msra.mxu0 %v1219
        %1414 = vmatprep.subr.mxu0 %v1224
        %1415 = vmatpush1.msra.mxu0 %v1223
        %1416 = vmatprep.subr.mxu0 %v1228
        %1417 = vmatpush1.msra.mxu0 %v1227
        %1418 = vmatprep.subr.mxu0 %v1232
        %1419 = vmatpush1.msra.mxu0 %v1231
        %1420 = vmatprep.subr.mxu0 %v1236
        %1421 = vmatpush1.msra.mxu0 %v1235
        %1422 = vmatprep.subr.mxu0 %v1240
        %1423 = vmatpush1.msra.mxu0 %v1239
        %1424 = vmatprep.subr.mxu0 %v1244
        %1425 = vmatpush1.msra.mxu0 %v1243
        %1426 = vmatprep.subr.mxu0 %v1248
        %1427 = vmatpush1.msra.mxu0 %v1247
        %1428 = vmatprep.subr.mxu0 %v1252
        %1429 = vmatpush1.msra.mxu0 %v1251
        %1430 = vmatprep.subr.mxu0 %v1256
        %1431 = vmatpush1.msra.mxu0 %v1255
        %1432 = vmatprep.subr.mxu0 %v1260
        %1433 = vmatpush1.msra.mxu0 %v1259
        %1434 = vmatprep.subr.mxu0 %v1264
        %1435 = vmatpush1.msra.mxu0 %v1263
        %1436 = vmatprep.subr.mxu0 %v1268
        %1437 = vmatpush1.msra.mxu0 %v1267
        %1438 = vmatprep.subr.mxu0 %v1272
        %1439 = vmatpush1.msra.mxu0 %v1271
        %1440 = vmatprep.subr.mxu0 %v1276
        %1441 = vmatpush1.msra.mxu0 %v1275
        %1442 = vmatprep.subr.mxu0 %v1280
        %1443 = vmatpush1.msra.mxu0 %v1279
        %1444 = vmatprep.subr.mxu0 %v1284
        %1445 = vmatpush1.msra.mxu0 %v1283
        %1446 = vmatprep.subr.mxu0 %v1288
        %1447 = vmatpush1.msra.mxu0 %v1287
        %1448 = vmatprep.subr.mxu0 %v1292
        %1449 = vmatpush1.msra.mxu0 %v1291
        %1450 = vmatprep.subr.mxu0 %v1296
        %1451 = vmatpush1.msra.mxu0 %v1295
        %1452 = vmatprep.subr.mxu0 %v1300
        %1453 = vmatpush1.msra.mxu0 %v1299
        %1454 = vmatprep.subr.mxu0 %v1304
        %1455 = vmatpush1.msra.mxu0 %v1303
        %1456 = vmatprep.subr.mxu0 %v1308
        %1457 = vmatpush1.msra.mxu0 %v1307
        %1458 = vmatprep.subr.mxu0 %v1312
        %1459 = vmatpush1.msra.mxu0 %v1311
        %1460 = vmatprep.subr.mxu0 %v1316
        %1461 = vmatpush1.msra.mxu0 %v1315
        %1462 = vmatprep.subr.mxu0 %v1320
        %1463 = vmatpush1.msra.mxu0 %v1319
        %1464 = vmatprep.subr.mxu0 %v1324
        %1465 = vmatpush1.msra.mxu0 %v1323
        %1466 = vmatprep.mubr.f32.mxu0 %v1192
        %1467 = vmatmul.mubr.f32.gmra.mrb[0].mxu0 %v1191
        %v1468 = vpop.f32.mrb[0].mxu0
        %v1469 = vadd.f32 0.0, %v1468
        %v1470 = vpop.f32.mrb[0].mxu0
        %v1471 = vadd.f32 0.0, %v1470
        %1472 = vmatprep.mubr.f32.mxu0 %v1194
        %1473 = vmatmul.mubr.f32.gmra.mrb[0].mxu0 %v1193
        %v1474 = vpop.f32.mrb[0].mxu0
        %v1475 = vadd.f32 0.0, %v1474
        %v1476 = vpop.f32.mrb[0].mxu0
        %v1477 = vadd.f32 0.0, %v1476
        %1478 = vdwg.mxu0
        %v1479 = vmul.f32 %v1392, %v1398
        %v1480 = vmul.f32 %v1394, %v1400
        %v1481 = vmul.f32 %v1469, %v1475
        %v1482 = vmul.f32 %v1471, %v1477
        %v1483 = vsub.f32 %v1479, %v1481
        %v1484 = vsub.f32 %v1480, %v1482
        %v1485 = vmul.f32 %v1392, %v1475
        %v1486 = vmul.f32 %v1394, %v1477
        %v1487 = vmul.f32 %v1469, %v1398
        %v1488 = vmul.f32 %v1471, %v1400
        %v1489 = vadd.f32 %v1485, %v1487
        %v1490 = vadd.f32 %v1486, %v1488
        %v1491 = vld [vmem:[#allocation5] sm:$0xff]
        %v1492 = vld [vmem:[#allocation5 + $0x8] sm:$0xff]
        %v1493 = vld [vmem:[#allocation5 + $0x10] sm:$0xff]
        %v1494 = vld [vmem:[#allocation5 + $0x18] sm:$0xff]
        %v1495 = vld [vmem:[#allocation5 + $0x20] sm:$0xff]
        %v1496 = vld [vmem:[#allocation5 + $0x28] sm:$0xff]
        %v1497 = vld [vmem:[#allocation5 + $0x30] sm:$0xff]
        %v1498 = vld [vmem:[#allocation5 + $0x38] sm:$0xff]
        %v1499 = vld [vmem:[#allocation5 + $0x40] sm:$0xff]
        %v1500 = vld [vmem:[#allocation5 + $0x48] sm:$0xff]
        %v1501 = vld [vmem:[#allocation5 + $0x50] sm:$0xff]
        %v1502 = vld [vmem:[#allocation5 + $0x58] sm:$0xff]
        %v1503 = vld [vmem:[#allocation5 + $0x60] sm:$0xff]
        %v1504 = vld [vmem:[#allocation5 + $0x68] sm:$0xff]
        %v1505 = vld [vmem:[#allocation5 + $0x70] sm:$0xff]
        %v1506 = vld [vmem:[#allocation5 + $0x78] sm:$0xff]
        %v1507 = vld [vmem:[#allocation5 + $0x80] sm:$0xff]
        %v1508 = vld [vmem:[#allocation5 + $0x88] sm:$0xff]
        %v1509 = vld [vmem:[#allocation5 + $0x90] sm:$0xff]
        %v1510 = vld [vmem:[#allocation5 + $0x98] sm:$0xff]
        %v1511 = vld [vmem:[#allocation5 + $0xa0] sm:$0xff]
        %v1512 = vld [vmem:[#allocation5 + $0xa8] sm:$0xff]
        %v1513 = vld [vmem:[#allocation5 + $0xb0] sm:$0xff]
        %v1514 = vld [vmem:[#allocation5 + $0xb8] sm:$0xff]
        %v1515 = vld [vmem:[#allocation5 + $0xc0] sm:$0xff]
        %v1516 = vld [vmem:[#allocation5 + $0xc8] sm:$0xff]
        %v1517 = vld [vmem:[#allocation5 + $0xd0] sm:$0xff]
        %v1518 = vld [vmem:[#allocation5 + $0xd8] sm:$0xff]
        %v1519 = vld [vmem:[#allocation5 + $0xe0] sm:$0xff]
        %v1520 = vld [vmem:[#allocation5 + $0xe8] sm:$0xff]
        %v1521 = vld [vmem:[#allocation5 + $0xf0] sm:$0xff]
        %v1522 = vld [vmem:[#allocation5 + $0xf8] sm:$0xff]
        %v1523 = vld [vmem:[#allocation5 + $0x100] sm:$0xff]
        %v1524 = vld [vmem:[#allocation5 + $0x108] sm:$0xff]
        %v1525 = vld [vmem:[#allocation5 + $0x110] sm:$0xff]
        %v1526 = vld [vmem:[#allocation5 + $0x118] sm:$0xff]
        %v1527 = vld [vmem:[#allocation5 + $0x120] sm:$0xff]
        %v1528 = vld [vmem:[#allocation5 + $0x128] sm:$0xff]
        %v1529 = vld [vmem:[#allocation5 + $0x130] sm:$0xff]
        %v1530 = vld [vmem:[#allocation5 + $0x138] sm:$0xff]
        %v1531 = vld [vmem:[#allocation5 + $0x140] sm:$0xff]
        %v1532 = vld [vmem:[#allocation5 + $0x148] sm:$0xff]
        %v1533 = vld [vmem:[#allocation5 + $0x150] sm:$0xff]
        %v1534 = vld [vmem:[#allocation5 + $0x158] sm:$0xff]
        %v1535 = vld [vmem:[#allocation5 + $0x160] sm:$0xff]
        %v1536 = vld [vmem:[#allocation5 + $0x168] sm:$0xff]
        %v1537 = vld [vmem:[#allocation5 + $0x170] sm:$0xff]
        %v1538 = vld [vmem:[#allocation5 + $0x178] sm:$0xff]
        %v1539 = vld [vmem:[#allocation5 + $0x180] sm:$0xff]
        %v1540 = vld [vmem:[#allocation5 + $0x188] sm:$0xff]
        %v1541 = vld [vmem:[#allocation5 + $0x190] sm:$0xff]
        %v1542 = vld [vmem:[#allocation5 + $0x198] sm:$0xff]
        %v1543 = vld [vmem:[#allocation5 + $0x1a0] sm:$0xff]
        %v1544 = vld [vmem:[#allocation5 + $0x1a8] sm:$0xff]
        %v1545 = vld [vmem:[#allocation5 + $0x1b0] sm:$0xff]
        %v1546 = vld [vmem:[#allocation5 + $0x1b8] sm:$0xff]
        %v1547 = vld [vmem:[#allocation5 + $0x1c0] sm:$0xff]
        %v1548 = vld [vmem:[#allocation5 + $0x1c8] sm:$0xff]
        %v1549 = vld [vmem:[#allocation5 + $0x1d0] sm:$0xff]
        %v1550 = vld [vmem:[#allocation5 + $0x1d8] sm:$0xff]
        %v1551 = vld [vmem:[#allocation5 + $0x1e0] sm:$0xff]
        %v1552 = vld [vmem:[#allocation5 + $0x1e8] sm:$0xff]
        %v1553 = vld [vmem:[#allocation5 + $0x1f0] sm:$0xff]
        %v1554 = vld [vmem:[#allocation5 + $0x1f8] sm:$0xff]
        %v1555 = vld [vmem:[#allocation5 + $0x200] sm:$0xff]
        %v1556 = vld [vmem:[#allocation5 + $0x208] sm:$0xff]
        %v1557 = vld [vmem:[#allocation5 + $0x210] sm:$0xff]
        %v1558 = vld [vmem:[#allocation5 + $0x218] sm:$0xff]
        %v1559 = vld [vmem:[#allocation5 + $0x220] sm:$0xff]
        %v1560 = vld [vmem:[#allocation5 + $0x228] sm:$0xff]
        %v1561 = vld [vmem:[#allocation5 + $0x230] sm:$0xff]
        %v1562 = vld [vmem:[#allocation5 + $0x238] sm:$0xff]
        %v1563 = vld [vmem:[#allocation5 + $0x240] sm:$0xff]
        %v1564 = vld [vmem:[#allocation5 + $0x248] sm:$0xff]
        %v1565 = vld [vmem:[#allocation5 + $0x250] sm:$0xff]
        %v1566 = vld [vmem:[#allocation5 + $0x258] sm:$0xff]
        %v1567 = vld [vmem:[#allocation5 + $0x260] sm:$0xff]
        %v1568 = vld [vmem:[#allocation5 + $0x268] sm:$0xff]
        %v1569 = vld [vmem:[#allocation5 + $0x270] sm:$0xff]
        %v1570 = vld [vmem:[#allocation5 + $0x278] sm:$0xff]
        %v1571 = vld [vmem:[#allocation5 + $0x280] sm:$0xff]
        %v1572 = vld [vmem:[#allocation5 + $0x288] sm:$0xff]
        %v1573 = vld [vmem:[#allocation5 + $0x290] sm:$0xff]
        %v1574 = vld [vmem:[#allocation5 + $0x298] sm:$0xff]
        %v1575 = vld [vmem:[#allocation5 + $0x2a0] sm:$0xff]
        %v1576 = vld [vmem:[#allocation5 + $0x2a8] sm:$0xff]
        %v1577 = vld [vmem:[#allocation5 + $0x2b0] sm:$0xff]
        %v1578 = vld [vmem:[#allocation5 + $0x2b8] sm:$0xff]
        %v1579 = vld [vmem:[#allocation5 + $0x2c0] sm:$0xff]
        %v1580 = vld [vmem:[#allocation5 + $0x2c8] sm:$0xff]
        %v1581 = vld [vmem:[#allocation5 + $0x2d0] sm:$0xff]
        %v1582 = vld [vmem:[#allocation5 + $0x2d8] sm:$0xff]
        %v1583 = vld [vmem:[#allocation5 + $0x2e0] sm:$0xff]
        %v1584 = vld [vmem:[#allocation5 + $0x2e8] sm:$0xff]
        %v1585 = vld [vmem:[#allocation5 + $0x2f0] sm:$0xff]
        %v1586 = vld [vmem:[#allocation5 + $0x2f8] sm:$0xff]
        %v1587 = vld [vmem:[#allocation5 + $0x300] sm:$0xff]
        %v1588 = vld [vmem:[#allocation5 + $0x308] sm:$0xff]
        %v1589 = vld [vmem:[#allocation5 + $0x310] sm:$0xff]
        %v1590 = vld [vmem:[#allocation5 + $0x318] sm:$0xff]
        %v1591 = vld [vmem:[#allocation5 + $0x320] sm:$0xff]
        %v1592 = vld [vmem:[#allocation5 + $0x328] sm:$0xff]
        %v1593 = vld [vmem:[#allocation5 + $0x330] sm:$0xff]
        %v1594 = vld [vmem:[#allocation5 + $0x338] sm:$0xff]
        %v1595 = vld [vmem:[#allocation5 + $0x340] sm:$0xff]
        %v1596 = vld [vmem:[#allocation5 + $0x348] sm:$0xff]
        %v1597 = vld [vmem:[#allocation5 + $0x350] sm:$0xff]
        %v1598 = vld [vmem:[#allocation5 + $0x358] sm:$0xff]
        %v1599 = vld [vmem:[#allocation5 + $0x360] sm:$0xff]
        %v1600 = vld [vmem:[#allocation5 + $0x368] sm:$0xff]
        %v1601 = vld [vmem:[#allocation5 + $0x370] sm:$0xff]
        %v1602 = vld [vmem:[#allocation5 + $0x378] sm:$0xff]
        %v1603 = vld [vmem:[#allocation5 + $0x380] sm:$0xff]
        %v1604 = vld [vmem:[#allocation5 + $0x388] sm:$0xff]
        %v1605 = vld [vmem:[#allocation5 + $0x390] sm:$0xff]
        %v1606 = vld [vmem:[#allocation5 + $0x398] sm:$0xff]
        %v1607 = vld [vmem:[#allocation5 + $0x3a0] sm:$0xff]
        %v1608 = vld [vmem:[#allocation5 + $0x3a8] sm:$0xff]
        %v1609 = vld [vmem:[#allocation5 + $0x3b0] sm:$0xff]
        %v1610 = vld [vmem:[#allocation5 + $0x3b8] sm:$0xff]
        %v1611 = vld [vmem:[#allocation5 + $0x3c0] sm:$0xff]
        %v1612 = vld [vmem:[#allocation5 + $0x3c8] sm:$0xff]
        %v1613 = vld [vmem:[#allocation5 + $0x3d0] sm:$0xff]
        %v1614 = vld [vmem:[#allocation5 + $0x3d8] sm:$0xff]
        %v1615 = vld [vmem:[#allocation5 + $0x3e0] sm:$0xff]
        %v1616 = vld [vmem:[#allocation5 + $0x3e8] sm:$0xff]
        %v1617 = vld [vmem:[#allocation5 + $0x3f0] sm:$0xff]
        %v1618 = vld [vmem:[#allocation5 + $0x3f8] sm:$0xff]
        %1619 = vmatprep.subr.mxu0 %v1492
        %1620 = vmatpush1.msra.mxu0 %v1491
        %1621 = vmatprep.subr.mxu0 %v1494
        %1622 = vmatpush1.msra.mxu0 %v1493
        %1623 = vmatprep.subr.mxu0 %v1496
        %1624 = vmatpush1.msra.mxu0 %v1495
        %1625 = vmatprep.subr.mxu0 %v1498
        %1626 = vmatpush1.msra.mxu0 %v1497
        %1627 = vmatprep.subr.mxu0 %v1500
        %1628 = vmatpush1.msra.mxu0 %v1499
        %1629 = vmatprep.subr.mxu0 %v1502
        %1630 = vmatpush1.msra.mxu0 %v1501
        %1631 = vmatprep.subr.mxu0 %v1504
        %1632 = vmatpush1.msra.mxu0 %v1503
        %1633 = vmatprep.subr.mxu0 %v1506
        %1634 = vmatpush1.msra.mxu0 %v1505
        %1635 = vmatprep.subr.mxu0 %v1508
        %1636 = vmatpush1.msra.mxu0 %v1507
        %1637 = vmatprep.subr.mxu0 %v1510
        %1638 = vmatpush1.msra.mxu0 %v1509
        %1639 = vmatprep.subr.mxu0 %v1512
        %1640 = vmatpush1.msra.mxu0 %v1511
        %1641 = vmatprep.subr.mxu0 %v1514
        %1642 = vmatpush1.msra.mxu0 %v1513
        %1643 = vmatprep.subr.mxu0 %v1516
        %1644 = vmatpush1.msra.mxu0 %v1515
        %1645 = vmatprep.subr.mxu0 %v1518
        %1646 = vmatpush1.msra.mxu0 %v1517
        %1647 = vmatprep.subr.mxu0 %v1520
        %1648 = vmatpush1.msra.mxu0 %v1519
        %1649 = vmatprep.subr.mxu0 %v1522
        %1650 = vmatpush1.msra.mxu0 %v1521
        %1651 = vmatprep.subr.mxu0 %v1524
        %1652 = vmatpush1.msra.mxu0 %v1523
        %1653 = vmatprep.subr.mxu0 %v1526
        %1654 = vmatpush1.msra.mxu0 %v1525
        %1655 = vmatprep.subr.mxu0 %v1528
        %1656 = vmatpush1.msra.mxu0 %v1527
        %1657 = vmatprep.subr.mxu0 %v1530
        %1658 = vmatpush1.msra.mxu0 %v1529
        %1659 = vmatprep.subr.mxu0 %v1532
        %1660 = vmatpush1.msra.mxu0 %v1531
        %1661 = vmatprep.subr.mxu0 %v1534
        %1662 = vmatpush1.msra.mxu0 %v1533
        %1663 = vmatprep.subr.mxu0 %v1536
        %1664 = vmatpush1.msra.mxu0 %v1535
        %1665 = vmatprep.subr.mxu0 %v1538
        %1666 = vmatpush1.msra.mxu0 %v1537
        %1667 = vmatprep.subr.mxu0 %v1540
        %1668 = vmatpush1.msra.mxu0 %v1539
        %1669 = vmatprep.subr.mxu0 %v1542
        %1670 = vmatpush1.msra.mxu0 %v1541
        %1671 = vmatprep.subr.mxu0 %v1544
        %1672 = vmatpush1.msra.mxu0 %v1543
        %1673 = vmatprep.subr.mxu0 %v1546
        %1674 = vmatpush1.msra.mxu0 %v1545
        %1675 = vmatprep.subr.mxu0 %v1548
        %1676 = vmatpush1.msra.mxu0 %v1547
        %1677 = vmatprep.subr.mxu0 %v1550
        %1678 = vmatpush1.msra.mxu0 %v1549
        %1679 = vmatprep.subr.mxu0 %v1552
        %1680 = vmatpush1.msra.mxu0 %v1551
        %1681 = vmatprep.subr.mxu0 %v1554
        %1682 = vmatpush1.msra.mxu0 %v1553
        %1683 = vmatprep.mubr.f32.mxu0 %v1484
        %1684 = vmatmul.mubr.f32.gmra.mrb[0].mxu0 %v1483
        %v1685 = vpop.f32.mrb[0].mxu0
        %v1686 = vadd.f32 0.0, %v1685
        %v1687 = vpop.f32.mrb[0].mxu0
        %v1688 = vadd.f32 0.0, %v1687
        %1689 = vdwg.mxu0
        %1690 = vmatprep.subr.mxu0 %v1556
        %1691 = vmatpush1.msra.mxu0 %v1555
        %1692 = vmatprep.subr.mxu0 %v1558
        %1693 = vmatpush1.msra.mxu0 %v1557
        %1694 = vmatprep.subr.mxu0 %v1560
        %1695 = vmatpush1.msra.mxu0 %v1559
        %1696 = vmatprep.subr.mxu0 %v1562
        %1697 = vmatpush1.msra.mxu0 %v1561
        %1698 = vmatprep.subr.mxu0 %v1564
        %1699 = vmatpush1.msra.mxu0 %v1563
        %1700 = vmatprep.subr.mxu0 %v1566
        %1701 = vmatpush1.msra.mxu0 %v1565
        %1702 = vmatprep.subr.mxu0 %v1568
        %1703 = vmatpush1.msra.mxu0 %v1567
        %1704 = vmatprep.subr.mxu0 %v1570
        %1705 = vmatpush1.msra.mxu0 %v1569
        %1706 = vmatprep.subr.mxu0 %v1572
        %1707 = vmatpush1.msra.mxu0 %v1571
        %1708 = vmatprep.subr.mxu0 %v1574
        %1709 = vmatpush1.msra.mxu0 %v1573
        %1710 = vmatprep.subr.mxu0 %v1576
        %1711 = vmatpush1.msra.mxu0 %v1575
        %1712 = vmatprep.subr.mxu0 %v1578
        %1713 = vmatpush1.msra.mxu0 %v1577
        %1714 = vmatprep.subr.mxu0 %v1580
        %1715 = vmatpush1.msra.mxu0 %v1579
        %1716 = vmatprep.subr.mxu0 %v1582
        %1717 = vmatpush1.msra.mxu0 %v1581
        %1718 = vmatprep.subr.mxu0 %v1584
        %1719 = vmatpush1.msra.mxu0 %v1583
        %1720 = vmatprep.subr.mxu0 %v1586
        %1721 = vmatpush1.msra.mxu0 %v1585
        %1722 = vmatprep.subr.mxu0 %v1588
        %1723 = vmatpush1.msra.mxu0 %v1587
        %1724 = vmatprep.subr.mxu0 %v1590
        %1725 = vmatpush1.msra.mxu0 %v1589
        %1726 = vmatprep.subr.mxu0 %v1592
        %1727 = vmatpush1.msra.mxu0 %v1591
        %1728 = vmatprep.subr.mxu0 %v1594
        %1729 = vmatpush1.msra.mxu0 %v1593
        %1730 = vmatprep.subr.mxu0 %v1596
        %1731 = vmatpush1.msra.mxu0 %v1595
        %1732 = vmatprep.subr.mxu0 %v1598
        %1733 = vmatpush1.msra.mxu0 %v1597
        %1734 = vmatprep.subr.mxu0 %v1600
        %1735 = vmatpush1.msra.mxu0 %v1599
        %1736 = vmatprep.subr.mxu0 %v1602
        %1737 = vmatpush1.msra.mxu0 %v1601
        %1738 = vmatprep.subr.mxu0 %v1604
        %1739 = vmatpush1.msra.mxu0 %v1603
        %1740 = vmatprep.subr.mxu0 %v1606
        %1741 = vmatpush1.msra.mxu0 %v1605
        %1742 = vmatprep.subr.mxu0 %v1608
        %1743 = vmatpush1.msra.mxu0 %v1607
        %1744 = vmatprep.subr.mxu0 %v1610
        %1745 = vmatpush1.msra.mxu0 %v1609
        %1746 = vmatprep.subr.mxu0 %v1612
        %1747 = vmatpush1.msra.mxu0 %v1611
        %1748 = vmatprep.subr.mxu0 %v1614
        %1749 = vmatpush1.msra.mxu0 %v1613
        %1750 = vmatprep.subr.mxu0 %v1616
        %1751 = vmatpush1.msra.mxu0 %v1615
        %1752 = vmatprep.subr.mxu0 %v1618
        %1753 = vmatpush1.msra.mxu0 %v1617
        %1754 = vmatprep.mubr.f32.mxu0 %v1490
        %1755 = vmatmul.mubr.f32.gmra.mrb[0].mxu0 %v1489
        %v1756 = vpop.f32.mrb[0].mxu0
        %v1757 = vadd.f32 %v1686, %v1756
        %v1758 = vpop.f32.mrb[0].mxu0
        %v1759 = vadd.f32 %v1688, %v1758
        %1760 = vdwg.mxu0
        %v1761 = vrot.slane %v1757, 4
        %v1762 = vadd.f32 %v1757, %v1761
        %v1763 = vrot.slane %v1762, 2
        %v1764 = vadd.f32 %v1762, %v1763
        %v1765 = vrot.slane %v1764, 1
        %v1766 = vadd.f32 %v1764, %v1765
        %v1767 = vrot.slane %v1759, 4
        %v1768 = vadd.f32 %v1759, %v1767
        %v1769 = vrot.slane %v1768, 2
        %v1770 = vadd.f32 %v1768, %v1769
        %v1771 = vrot.slane %v1770, 1
        %v1772 = vadd.f32 %v1770, %v1771
        %v1773 = vrcp.pop 8.0
        %v1774 = vmul.f32 %v1766, %v1773
        %v1775 = vmul.f32 %v1772, %v1773
        %v1776 = vsub.f32 %v1757, %v1774
        %v1777 = vsub.f32 %v1759, %v1775
        %v1778 = vmul.f32 %v1776, %v1776
        %v1779 = vmul.f32 %v1777, %v1777
        %v1780 = vrot.slane %v1778, 4
        %v1781 = vadd.f32 %v1778, %v1780
        %v1782 = vrot.slane %v1781, 2
        %v1783 = vadd.f32 %v1781, %v1782
        %v1784 = vrot.slane %v1783, 1
        %v1785 = vadd.f32 %v1783, %v1784
        %v1786 = vrot.slane %v1779, 4
        %v1787 = vadd.f32 %v1779, %v1786
        %v1788 = vrot.slane %v1787, 2
        %v1789 = vadd.f32 %v1787, %v1788
        %v1790 = vrot.slane %v1789, 1
        %v1791 = vadd.f32 %v1789, %v1790
        %v1792 = vmul.f32 %v1785, %v1773
        %v1793 = vmul.f32 %v1791, %v1773
        %v1794 = vadd.f32 %v1792, 1e-05
        %v1795 = vadd.f32 %v1793, 1e-05
        %v1796 = vrsqrt.pop %v1794
        %v1797 = vrsqrt.pop %v1795
        %v1798 = vmul.f32 %v1776, %v1796
        %v1799 = vmul.f32 %v1777, %v1797
        %v1800 = vld [vmem:[%s8] sm:$0xff]
        %1802 = vset.pattern.permute.xlu0 0
        %1803 = vperm.xlu0 %1802, %v1800
        %v1804 = vpop.permute.xlu0 %1803
        %v1806 = vmul.f32 %v1798, %v1804
        %v1807 = vmul.f32 %v1799, %v1804
        %v1808 = vld [vmem:[%s9] sm:$0xff]
        %1810 = vset.pattern.permute.xlu0 0
        %1811 = vperm.xlu0 %1810, %v1808
        %v1812 = vpop.permute.xlu0 %1811
        %v1814 = vadd.f32 %v1806, %v1812
        %v1815 = vadd.f32 %v1807, %v1812
        %v1816 = vmul.f32 %v1195, %v1814
        %v1817 = vmul.f32 %v1196, %v1815
        %v1818 = vld [vmem:[%s10] sm:$0xf]
        %vm1819 = vcmask 64512
        %v1821 = vsel %vm1819, %v1818, 0
        %1823 = vmatprep.subr.mxu0 %v1817
        %1824 = vmatpush1.msra.mxu0 %v1816
        %1825 = vmatprep.subr.mxu0 0.0
        %1826 = vmatpush1.msra.mxu0 0.0
        %1827 = vmatprep.subr.mxu0 0.0
        %1828 = vmatpush1.msra.mxu0 0.0
        %1829 = vmatprep.subr.mxu0 0.0
        %1830 = vmatpush1.msra.mxu0 0.0
        %1831 = vmatprep.subr.mxu0 0.0
        %1832 = vmatpush1.msra.mxu0 0.0
        %1833 = vmatprep.subr.mxu0 0.0
        %1834 = vmatpush1.msra.mxu0 0.0
        %1835 = vmatprep.subr.mxu0 0.0
        %1836 = vmatpush1.msra.mxu0 0.0
        %1837 = vmatprep.subr.mxu0 0.0
        %1838 = vmatpush1.msra.mxu0 0.0
        %1839 = vmatprep.subr.mxu0 0.0
        %1840 = vmatpush1.msra.mxu0 0.0
        %1841 = vmatprep.subr.mxu0 0.0
        %1842 = vmatpush1.msra.mxu0 0.0
        %1843 = vmatprep.subr.mxu0 0.0
        %1844 = vmatpush1.msra.mxu0 0.0
        %1845 = vmatprep.subr.mxu0 0.0
        %1846 = vmatpush1.msra.mxu0 0.0
        %1847 = vmatprep.subr.mxu0 0.0
        %1848 = vmatpush1.msra.mxu0 0.0
        %1849 = vmatprep.subr.mxu0 0.0
        %1850 = vmatpush1.msra.mxu0 0.0
        %1851 = vmatprep.subr.mxu0 0.0
        %1852 = vmatpush1.msra.mxu0 0.0
        %1853 = vmatprep.subr.mxu0 0.0
        %1854 = vmatpush1.msra.mxu0 0.0
        %1855 = vmatprep.subr.mxu0 0.0
        %1856 = vmatpush1.msra.mxu0 0.0
        %1857 = vmatprep.subr.mxu0 0.0
        %1858 = vmatpush1.msra.mxu0 0.0
        %1859 = vmatprep.subr.mxu0 0.0
        %1860 = vmatpush1.msra.mxu0 0.0
        %1861 = vmatprep.subr.mxu0 0.0
        %1862 = vmatpush1.msra.mxu0 0.0
        %1863 = vmatprep.subr.mxu0 0.0
        %1864 = vmatpush1.msra.mxu0 0.0
        %1865 = vmatprep.subr.mxu0 0.0
        %1866 = vmatpush1.msra.mxu0 0.0
        %1867 = vmatprep.subr.mxu0 0.0
        %1868 = vmatpush1.msra.mxu0 0.0
        %1869 = vmatprep.subr.mxu0 0.0
        %1870 = vmatpush1.msra.mxu0 0.0
        %1871 = vmatprep.subr.mxu0 0.0
        %1872 = vmatpush1.msra.mxu0 0.0
        %1873 = vmatprep.subr.mxu0 0.0
        %1874 = vmatpush1.msra.mxu0 0.0
        %1875 = vmatprep.subr.mxu0 0.0
        %1876 = vmatpush1.msra.mxu0 0.0
        %1877 = vmatprep.subr.mxu0 0.0
        %1878 = vmatpush1.msra.mxu0 0.0
        %1879 = vmatprep.subr.mxu0 0.0
        %1880 = vmatpush1.msra.mxu0 0.0
        %1881 = vmatprep.subr.mxu0 0.0
        %1882 = vmatpush1.msra.mxu0 0.0
        %1883 = vmatprep.subr.mxu0 0.0
        %1884 = vmatpush1.msra.mxu0 0.0
        %1885 = vmatprep.subr.mxu0 0.0
        %1886 = vmatpush1.msra.mxu0 0.0
        %1887 = vmatprep.mubr.f32.mxu0 0.0
        %1888 = vmatmul.mubr.f32.gmra.mrb[0].mxu0 %v1821
        %v1889 = vpop.f32.mrb[0].mxu0
        %v1890 = vadd.f32 0.0, %v1889
        %v1891 = vpop.f32.mrb[0].mxu0
        %v1892 = vadd.f32 0.0, %v1891
        %1893 = vdwg.mxu0
        %v1896 = vcombine.low %v1890, %v1892
        %v1898 = vadd.f32 %v415, %v1896
        %1899 = vst [vmem:[%s409] sm:$0xff] %v1898
        %s1900 = sand.u32 %s271, 1
        %s1901 = scalar_lea.sflag [#allocation4], %s1900
        %s1902 = sand.u32 %s271, 1
        %s1903 = smul.addr %s1902, 8
        %s1904 = scalar_lea.vmem [#allocation7], %s1903
        // Predicated region
        $region73: #{tpu_custom_call.1} parent=63 // pred_check
          %p1905 = pneg %p281
        $region74: #{tpu_custom_call.1} parent=63 // pred_check_branch
          %1907 = sbr.rel (%p1905) target = $region76
        $region75: #{tpu_custom_call.1} parent=63 // pred_region
          %s1909 = ssub.s32 128, 128
          %1910 = vsyncadd %s1901, %s1909
          %s1911 = smul.addr %s27, 2
          %s1912 = smul.addr %s1911, 64
          %s1913 = scalar_lea.hbm %s11, %s1912
          %s1915 = sshll.u32 %s1904, 4
          %s1916 = int_to_ptr.vmem [resolvable:$true] %s1915
          %1918 = dma.vmem_to_hbm [thread:$0]  %s1916, 128, %s1913, %s1901
        $region76: #{tpu_custom_call.1} parent=63 // pred_fallthru
          _
      $region64: #{tpu_custom_call.1} parent=5 // pred_fallthru
        _
      %p1919 = scmp.le.s32.totalorder 2, %s22
      // Predicated region
      $region77: #{tpu_custom_call.1} parent=5 // pred_check
        %p1920 = pneg %p1919
      $region78: #{tpu_custom_call.1} parent=5 // pred_check_branch
        %1922 = sbr.rel (%p1920) target = $region80
      $region79: #{tpu_custom_call.1} parent=5 // pred_region
        %s1923 = ssub.s32 %s22, 2
        // Predicated region
        $region81: #{tpu_custom_call.1} parent=79 // pred_check
          %p1924 = pneg %p287
        $region82: #{tpu_custom_call.1} parent=79 // pred_check_branch
          %1926 = sbr.rel (%p1924) target = $region84
        $region83: #{tpu_custom_call.1} parent=79 // pred_region
          %s1927 = sand.u32 %s272, 1
          %s1928 = scalar_lea.sflag [#allocation4], %s1927
          %s1929 = sand.u32 %s272, 1
          %s1930 = smul.addr %s1929, 8
          %s1931 = scalar_lea.vmem [#allocation7], %s1930
          %1932 = dma.done %s1928, 128
        $region84: #{tpu_custom_call.1} parent=79 // pred_fallthru
          _
      $region80: #{tpu_custom_call.1} parent=5 // pred_fallthru
        _
    $region6: #{tpu_custom_call.1} parent=1 // loop_footer
      %s26 = sadd.s32 1, %s22
    $region7: #{tpu_custom_call.1} parent=1 // loop_footer_branch
      %21 = sbr.rel target = $region3
    $region8: #{tpu_custom_call.1} parent=1 // loop_exit
      _
    %1933 = vsyncpa [#allocation3], 1
    %s1934 = scalar_lea.sflag [#allocation3], 1
    %1935 = vsyncpa %s1934, 1
    %1936 = vsyncpa [#allocation6], 1
    %1937 = vsyncpa [#allocation4], 1
    %s1938 = scalar_lea.sflag [#allocation4], 1
    %1939 = vsyncpa %s1938, 1

</llo_original>
